<compile_context>
chip_gen: v6e
topology: v6e:2x2x1
jax: 0.10.0
libtpu: 0.0.40
codegen_flags: <defaults>
</compile_context>

<pallas_src>
import jax
import jax.numpy as jnp
from jax import lax
from jax.experimental import pallas as pl
from jax.experimental.pallas import tpu as pltpu

# ---- model hyperparameters (TGATModel defaults) ----
IN_DIM = 1
HIDDEN = 32
HEADS = 2
NUM_LAYERS = 2          # layer0: heads=2, layer1: heads=1

# ---- problem sizes (small, synthetic) ----
N_NODES = 8             # nodes per graph snapshot
T_STEPS = 8             # snapshot sequence length
TN = T_STEPS * N_NODES  # flattened (time, node) axis

LANES = 128             # TPU lane width


# ---------------- parameter slab layout (static) ----------------
def _round_up(x, m):
    return (x + m - 1) // m * m


# shapes of the entries stored in the packed parameter slab (cols <= 128)
PARAM_SHAPES = {
    "w0":    (IN_DIM, HEADS * HIDDEN),   # layer0 projection row (IN_DIM == 1)
    "as0p":  (HEADS, HEADS * HIDDEN),    # layer0 a_src, block-packed per head
    "ad0p":  (HEADS, HEADS * HIDDEN),    # layer0 a_dst, block-packed per head
    "b0":    (1, HEADS * HIDDEN),
    "w1":    (HEADS * HIDDEN, HIDDEN),
    "as1":   (1, HIDDEN),
    "ad1":   (1, HIDDEN),
    "b1":    (1, HIDDEN),
    "wih_t": (HIDDEN, 3 * HIDDEN),
    "whh_t": (HIDDEN, 3 * HIDDEN),
    "bih":   (1, 3 * HIDDEN),
    "bhh":   (1, 3 * HIDDEN),
    "wfc_t": (HIDDEN, 1),                # stored in col 0, cols 1..127 zero
    "bfc":   (1, 1),                     # stored in col 0, cols 1..127 zero
}

PARAM_OFFSETS = {}
_off = 0
for _name, (_r, _c) in PARAM_SHAPES.items():
    PARAM_OFFSETS[_name] = _off
    _off += _round_up(_r, 8)             # keep every entry sublane-aligned
SLAB_ROWS = _off                         # 240 rows -> 120 KiB of f32


# ---------------- math helpers (shared by kernel and reference) ----------------
def _elu(x):
    # exp only sees non-positive arguments (no +inf in the dead branch)
    return jnp.where(x > 0, x, jnp.exp(jnp.minimum(x, 0.0)) - 1.0)


def _leaky_relu(x, slope=0.2):
    return jnp.where(x > 0, x, slope * x)


def _sigmoid(x):
    # numerically stable tanh-based sigmoid (no exp overflow for large |x|)
    return 0.5 * (jnp.tanh(0.5 * x) + 1.0)


# ---------------- in-kernel GAT attention (flat / block-diagonal graph) ----------------
def _gat_attention(z, adj_bias, a_src_packed, a_dst_packed, heads, out_dim):
    """Masked multi-head GAT attention on a flat (block-diagonal) graph.

    z:            [M, heads*out_dim]   projected features
    adj_bias:     [M, M] additive mask, 0 where edge j -> i exists, -1e30 else
    a_src_packed: [heads, heads*out_dim]  a_src[h] in its head's column block
    a_dst_packed: [heads, heads*out_dim]  a_dst[h] in its head's column block
    """
    M = z.shape[0]
    # One MXU push per logit family, all heads at once.
    es_all = lax.dot_general(a_src_packed, z, (((1,), (1,)), ((), ())),
                             preferred_element_type=jnp.float32)        # [heads, M]
    ed_all = lax.dot_general(z, a_dst_packed, (((1,), (1,)), ((), ())),
                             preferred_element_type=jnp.float32)        # [M, heads]

    if heads == 1:
        logits = _leaky_relu(ed_all + es_all) + adj_bias                # [M, M]
        m = jnp.max(logits, axis=-1, keepdims=True)
        p = jnp.exp(logits - m)        # masked entries underflow to exactly 0
        out_un = jnp.dot(p, z, preferred_element_type=jnp.float32)      # [M, D]
        inv = pl.reciprocal(jnp.sum(p, axis=-1, keepdims=True), approx=True)
        return out_un * inv

    # heads > 1: stack heads along sublanes -> one elementwise/softmax pass.
    ed_col = jnp.concatenate([ed_all[:, h:h + 1] for h in range(heads)],
                             axis=0)                                    # [heads*M, 1]
    es_rows = jnp.concatenate(
        [jnp.broadcast_to(es_all[h:h + 1, :], (M, M)) for h in range(heads)],
        axis=0)                                                         # [heads*M, M]
    bias_stk = jnp.concatenate([adj_bias] * heads, axis=0)              # [heads*M, M]

    logits = _leaky_relu(ed_col + es_rows) + bias_stk                   # [heads*M, M]
    m = jnp.max(logits, axis=-1, keepdims=True)
    p = jnp.exp(logits - m)            # masked entries underflow to exactly 0
    inv = pl.reciprocal(jnp.sum(p, axis=-1, keepdims=True), approx=True)  # [heads*M, 1]

    outs = []
    for h in range(heads):
        ph = p[h * M:(h + 1) * M, :]                                    # [M, M]
        zh = z[:, h * out_dim:(h + 1) * out_dim]                        # [M, D]
        oh = jnp.dot(ph, zh, preferred_element_type=jnp.float32)        # unnormalized
        outs.append(oh * inv[h * M:(h + 1) * M, :])
    return jnp.concatenate(outs, axis=-1)


# ---------------------------- Pallas kernel ----------------------------
def tgat_kernel(x_ref, adj_ref, slab_ref, out_ref):
    def param(name):
        r, c = PARAM_SHAPES[name]
        off = PARAM_OFFSETS[name]
        return slab_ref[off:off + r, 0:c]

    x = x_ref[...]                        # [TN, 1]
    adj_bias = adj_ref[...]               # [TN, TN] additive mask (0 / -1e30)

    # ---- GAT layer 0 (2 heads): K==1 projection as VPU broadcast multiply ----
    z0 = x * param("w0")                  # [TN, 1] * [1, 2H] -> [TN, 2H]
    h0 = _gat_attention(z0, adj_bias, param("as0p"), param("ad0p"), HEADS, HIDDEN)
    h0 = _elu(h0 + param("b0"))           # dropout between layers: identity at inference

    # ---- GAT layer 1 (1 head) ----
    z1 = jnp.dot(h0, param("w1"), preferred_element_type=jnp.float32)   # [TN, H]
    h1 = _gat_attention(z1, adj_bias, param("as1"), param("ad1"), 1, HIDDEN)
    h1 = _elu(h1 + param("b1"))           # [TN, H]

    # ---- GRU input transform batched over all T snapshots, kept in registers ----
    gi_all = (jnp.dot(h1, param("wih_t"), preferred_element_type=jnp.float32)
              + param("bih"))             # [TN, 3H] -> ~6 vregs

    whh = param("whh_t")                  # [H, 3H]
    bhh = param("bhh")                    # [1, 3H]

    h = jnp.zeros((N_NODES, HIDDEN), jnp.float32)
    for t in range(T_STEPS):              # static unrolled recurrence (T=8)
        gi = gi_all[t * N_NODES:(t + 1) * N_NODES, :]                       # [N, 3H]
        gh = jnp.dot(h, whh, preferred_element_type=jnp.float32) + bhh      # [N, 3H]
        rz = _sigmoid(gi[:, 0:2 * HIDDEN] + gh[:, 0:2 * HIDDEN])            # fused r,z
        r = rz[:, 0:HIDDEN]
        z = rz[:, HIDDEN:2 * HIDDEN]
        n = jnp.tanh(gi[:, 2 * HIDDEN:3 * HIDDEN]
                     + r * gh[:, 2 * HIDDEN:3 * HIDDEN])
        h = n + z * (h - n)               # == (1 - z) * n + z * h

    # ---- fc_out, once, lane-dense: W_fc / b_fc stored zero-padded to 128 lanes ----
    wfc_off = PARAM_OFFSETS["wfc_t"]
    bfc_off = PARAM_OFFSETS["bfc"]
    wfc_wide = slab_ref[wfc_off:wfc_off + HIDDEN, :]      # [H, 128]
    bfc_wide = slab_ref[bfc_off:bfc_off + 1, :]           # [1, 128]
    out_ref[...] = (jnp.dot(h, wfc_wide, preferred_element_type=jnp.float32)
                    + bfc_wide)                           # column 0 = prediction


# ---------------------------- wrapper ----------------------------
def pack_params(params):
    """Pack all parameters into one sublane-aligned [SLAB_ROWS, 128] f32 slab."""
    vals = dict(params)
    as0p = jnp.zeros((HEADS, HEADS * HIDDEN), jnp.float32)
    ad0p = jnp.zeros((HEADS, HEADS * HIDDEN), jnp.float32)
    for h in range(HEADS):
        as0p = as0p.at[h, h * HIDDEN:(h + 1) * HIDDEN].set(params["as0"][h])
        ad0p = ad0p.at[h, h * HIDDEN:(h + 1) * HIDDEN].set(params["ad0"][h])
    vals["as0p"] = as0p
    vals["ad0p"] = ad0p
    slab = jnp.zeros((SLAB_ROWS, LANES), jnp.float32)
    for name, (r, c) in PARAM_SHAPES.items():
        off = PARAM_OFFSETS[name]
        slab = slab.at[off:off + r, :c].set(vals[name].astype(jnp.float32))
    return slab


def tgat_forward(x_seq, adj_seq, params):
    """x_seq: [T, N, IN_DIM], adj_seq: [T, N, N] (self-loops included) -> [N, 1]."""
    T, N, in_dim = x_seq.shape
    assert (T, N, in_dim) == (T_STEPS, N_NODES, IN_DIM)
    tn = T * N

    # Layout plumbing only: flatten (time, node), build the block-diagonal
    # adjacency so the whole GAT phase is batched over T inside the kernel,
    # and turn it into an additive bias (0 / -1e30) so the kernel does no
    # compare / select.
    x_flat = x_seq.reshape(tn, in_dim).astype(jnp.float32)
    eye_t = jnp.eye(T, dtype=jnp.float32)
    adj_big = (eye_t[:, None, :, None] * adj_seq[:, :, None, :]).reshape(tn, tn)
    adj_bias = jnp.where(adj_big > 0, jnp.float32(0.0), jnp.float32(-1e30))
    slab = pack_params(params)

    out_wide = pl.pallas_call(
        tgat_kernel,
        out_shape=jax.ShapeDtypeStruct((N, LANES), jnp.float32),
        in_specs=[pl.BlockSpec(memory_space=pltpu.MemorySpace.VMEM)] * 3,
        out_specs=pl.BlockSpec(memory_space=pltpu.MemorySpace.VMEM),
    )(x_flat, adj_bias, slab)
    return out_wide[:, :1]


# ---------------------------- parameter init (deterministic) ----------------------------
def init_params(key):
    def xavier(k, shape):
        fan_in, fan_out = shape[0], shape[1]
        limit = jnp.sqrt(6.0 / (fan_in + fan_out))
        return jax.random.uniform(k, shape, jnp.float32, -limit, limit)

    ks = jax.random.split(key, 9)
    return {
        # GAT layer 0: in_dim -> hidden, heads=2
        "w0": xavier(ks[0], (IN_DIM, HEADS * HIDDEN)),
        "as0": 0.1 * jax.random.normal(ks[1], (HEADS, HIDDEN), jnp.float32),
        "ad0": 0.1 * jax.random.normal(ks[2], (HEADS, HIDDEN), jnp.float32),
        "b0": jnp.zeros((1, HEADS * HIDDEN), jnp.float32),
        # GAT layer 1: hidden*heads -> hidden, heads=1
        "w1": xavier(ks[3], (HEADS * HIDDEN, HIDDEN)),
        "as1": 0.1 * jax.random.normal(ks[4], (1, HIDDEN), jnp.float32),
        "ad1": 0.1 * jax.random.normal(ks[5], (1, HIDDEN), jnp.float32),
        "b1": jnp.zeros((1, HIDDEN), jnp.float32),
        # GRU (weights pre-transposed, gate order r,z,n; biases zero per _init_weights)
        "wih_t": xavier(ks[6], (HIDDEN, 3 * HIDDEN)),
        "whh_t": xavier(ks[7], (HIDDEN, 3 * HIDDEN)),
        "bih": jnp.zeros((1, 3 * HIDDEN), jnp.float32),
        "bhh": jnp.zeros((1, 3 * HIDDEN), jnp.float32),
        # fc_out (bias zero per _init_weights)
        "wfc_t": xavier(ks[8], (HIDDEN, 1)),
        "bfc": jnp.zeros((1, 1), jnp.float32),
    }


# ---------------------------- pure-JAX reference ----------------------------
def _gat_layer_ref(x, adj, W, a_src, a_dst, bias, heads, out_dim):
    z = jnp.dot(x, W, preferred_element_type=jnp.float32)   # [N, heads*out_dim]
    mask = adj > 0
    head_outs = []
    for h in range(heads):
        zh = z[:, h * out_dim:(h + 1) * out_dim]
        es_row = lax.dot_general(a_src[h:h + 1, :], zh, (((1,), (1,)), ((), ())),
                                 preferred_element_type=jnp.float32)   # [1, N]
        ed_col = lax.dot_general(zh, a_dst[h:h + 1, :], (((1,), (1,)), ((), ())),
                                 preferred_element_type=jnp.float32)   # [N, 1]
        logits = jnp.where(mask, _leaky_relu(ed_col + es_row), -1e30)
        m = jnp.max(logits, axis=-1, keepdims=True)
        p = jnp.exp(logits - m)
        alpha = p / jnp.sum(p, axis=-1, keepdims=True)
        head_outs.append(jnp.dot(alpha, zh, preferred_element_type=jnp.float32))
    out = head_outs[0] if heads == 1 else jnp.concatenate(head_outs, axis=-1)
    return out + bias


def _gru_cell_ref(x, h, wih_t, whh_t, bih, bhh, hidden):
    gi = jnp.dot(x, wih_t, preferred_element_type=jnp.float32) + bih
    gh = jnp.dot(h, whh_t, preferred_element_type=jnp.float32) + bhh
    r = _sigmoid(gi[:, 0:hidden] + gh[:, 0:hidden])
    z = _sigmoid(gi[:, hidden:2 * hidden] + gh[:, hidden:2 * hidden])
    n = jnp.tanh(gi[:, 2 * hidden:3 * hidden] + r * gh[:, 2 * hidden:3 * hidden])
    return (1.0 - z) * n + z * h


def tgat_reference(x_seq, adj_seq, params):
    T, N, _ = x_seq.shape
    h = jnp.zeros((N, HIDDEN), jnp.float32)
    for t in range(T):
        x = _elu(_gat_layer_ref(x_seq[t], adj_seq[t], params["w0"], params["as0"],
                                params["ad0"], params["b0"], HEADS, HIDDEN))
        x = _elu(_gat_layer_ref(x, adj_seq[t], params["w1"], params["as1"],
                                params["ad1"], params["b1"], 1, HIDDEN))
        h = _gru_cell_ref(x, h, params["wih_t"], params["whh_t"],
                          params["bih"], params["bhh"], HIDDEN)
    return jnp.dot(h, params["wfc_t"]) + params["bfc"]


if __name__ == "__main__":
    key = jax.random.PRNGKey(0)
    k_x, k_adj, k_p = jax.random.split(key, 3)

    # Snapshot sequence of node features, [T, N, 1].
    x_seq = jax.random.normal(k_x, (T_STEPS, N_NODES, IN_DIM), jnp.float32)
    # Random directed adjacency per snapshot + self loops (dense mask stands in
    # for the sparse edge_index of torch_geometric Data).
    rand_adj = (jax.random.uniform(k_adj, (T_STEPS, N_NODES, N_NODES)) < 0.4
                ).astype(jnp.float32)
    eye = jnp.eye(N_NODES, dtype=jnp.float32)[None]
    adj_seq = jnp.maximum(rand_adj, eye)

    params = init_params(k_p)

    out = tgat_forward(x_seq, adj_seq, params)
    out = jax.block_until_ready(out)
    assert out.shape == (N_NODES, 1)

    ref = tgat_reference(x_seq, adj_seq, params)
    if not jnp.allclose(out, ref, atol=1e-2, rtol=1e-2):
        raise AssertionError(
            f"kernel/reference mismatch, max abs diff = {jnp.max(jnp.abs(out - ref))}")

    print("KERNEL_OK")
</pallas_src>

<mosaic_0001>
module attributes {stable_mosaic.version = 11 : i64} {
  func.func @tgat_kernel(%arg0: memref<64x1xf32, #tpu.memory_space<vmem>>, %arg1: memref<64x64xf32, #tpu.memory_space<vmem>>, %arg2: memref<240x128xf32, #tpu.memory_space<vmem>>, %arg3: memref<8x128xf32, #tpu.memory_space<vmem>>) attributes {dimension_semantics = [], scalar_prefetch = 0 : i64, scratch_operands = 0 : i64, tpu.core_type = #tpu.core_type<tc>} {
    %c0 = arith.constant 0 : index
    %c0_0 = arith.constant 0 : index
    %0 = vector.load %arg0[%c0, %c0_0] : memref<64x1xf32, #tpu.memory_space<vmem>>, vector<64x1xf32>
    %c0_1 = arith.constant 0 : index
    %c0_2 = arith.constant 0 : index
    %1 = vector.load %arg1[%c0_1, %c0_2] : memref<64x64xf32, #tpu.memory_space<vmem>>, vector<64x64xf32>
    %c0_3 = arith.constant 0 : index
    %c0_4 = arith.constant 0 : index
    %2 = vector.load %arg2[%c0_3, %c0_4] : memref<240x128xf32, #tpu.memory_space<vmem>>, vector<1x64xf32>
    %3 = vector.broadcast %0 : vector<64x1xf32> to vector<64x64xf32>
    %4 = vector.broadcast %2 : vector<1x64xf32> to vector<64x64xf32>
    %5 = arith.mulf %3, %4 : vector<64x64xf32>
    %c8 = arith.constant 8 : index
    %c0_5 = arith.constant 0 : index
    %6 = vector.load %arg2[%c8, %c0_5] : memref<240x128xf32, #tpu.memory_space<vmem>>, vector<2x64xf32>
    %c16 = arith.constant 16 : index
    %c0_6 = arith.constant 0 : index
    %7 = vector.load %arg2[%c16, %c0_6] : memref<240x128xf32, #tpu.memory_space<vmem>>, vector<2x64xf32>
    %cst = arith.constant dense<0.000000e+00> : vector<2x64xf32>
    %8 = tpu.matmul %6, %5, %cst {dimension_numbers = #tpu.dot_dimension_numbers<[1], [1], [0], [0], [0, 0, 1, 0], [], []>} : vector<2x64xf32>, vector<64x64xf32>, vector<2x64xf32> -> vector<2x64xf32>
    %cst_7 = arith.constant dense<0.000000e+00> : vector<64x2xf32>
    %9 = tpu.matmul %5, %7, %cst_7 {dimension_numbers = #tpu.dot_dimension_numbers<[1], [1], [0], [0], [0, 0, 1, 0], [], []>} : vector<64x64xf32>, vector<2x64xf32>, vector<64x2xf32> -> vector<64x2xf32>
    %10 = vector.extract_strided_slice %9 {offsets = [0, 0], sizes = [64, 1], strides = [1, 1]} : vector<64x2xf32> to vector<64x1xf32>
    %11 = vector.extract_strided_slice %9 {offsets = [0, 1], sizes = [64, 1], strides = [1, 1]} : vector<64x2xf32> to vector<64x1xf32>
    %12 = tpu.concatenate %10, %11 in 0 : vector<64x1xf32>, vector<64x1xf32> -> vector<128x1xf32>
    %13 = vector.extract_strided_slice %8 {offsets = [0, 0], sizes = [1, 64], strides = [1, 1]} : vector<2x64xf32> to vector<1x64xf32>
    %14 = vector.shape_cast %13 : vector<1x64xf32> to vector<1x64xf32>
    %15 = vector.broadcast %14 : vector<1x64xf32> to vector<64x64xf32>
    %16 = vector.extract_strided_slice %8 {offsets = [1, 0], sizes = [1, 64], strides = [1, 1]} : vector<2x64xf32> to vector<1x64xf32>
    %17 = vector.shape_cast %16 : vector<1x64xf32> to vector<1x64xf32>
    %18 = vector.broadcast %17 : vector<1x64xf32> to vector<64x64xf32>
    %19 = tpu.concatenate %15, %18 in 0 : vector<64x64xf32>, vector<64x64xf32> -> vector<128x64xf32>
    %20 = tpu.concatenate %1, %1 in 0 : vector<64x64xf32>, vector<64x64xf32> -> vector<128x64xf32>
    %21 = vector.broadcast %12 : vector<128x1xf32> to vector<128x64xf32>
    %22 = arith.addf %21, %19 : vector<128x64xf32>
    %cst_8 = arith.constant 0.000000e+00 : f32
    %23 = vector.broadcast %cst_8 : f32 to vector<128x64xf32>
    %24 = arith.cmpf ogt, %22, %23 : vector<128x64xf32>
    %cst_9 = arith.constant 2.000000e-01 : f32
    %25 = vector.broadcast %cst_9 : f32 to vector<128x64xf32>
    %26 = arith.mulf %25, %22 : vector<128x64xf32>
    %27 = arith.select %24, %22, %26 : vector<128x64xi1>, vector<128x64xf32>
    %28 = arith.addf %27, %20 : vector<128x64xf32>
    %cst_10 = arith.constant dense<0xFF800000> : vector<128xf32>
    %29 = vector.multi_reduction <maximumf>, %28, %cst_10 [1] : vector<128x64xf32> to vector<128xf32>
    %30 = vector.shape_cast %29 : vector<128xf32> to vector<128x1xf32>
    %31 = vector.broadcast %30 : vector<128x1xf32> to vector<128x64xf32>
    %32 = arith.subf %28, %31 : vector<128x64xf32>
    %33 = math.exp %32 : vector<128x64xf32>
    %cst_11 = arith.constant dense<0.000000e+00> : vector<128xf32>
    %34 = vector.multi_reduction <add>, %33, %cst_11 [1] : vector<128x64xf32> to vector<128xf32>
    %35 = vector.shape_cast %34 : vector<128xf32> to vector<128x1xf32>
    %36 = tpu.reciprocal %35 {approx = true} : vector<128x1xf32> -> vector<128x1xf32>
    %37 = vector.extract_strided_slice %33 {offsets = [0, 0], sizes = [64, 64], strides = [1, 1]} : vector<128x64xf32> to vector<64x64xf32>
    %38 = vector.extract_strided_slice %5 {offsets = [0, 0], sizes = [64, 32], strides = [1, 1]} : vector<64x64xf32> to vector<64x32xf32>
    %cst_12 = arith.constant dense<0.000000e+00> : vector<64x32xf32>
    %39 = tpu.matmul %37, %38, %cst_12 {dimension_numbers = #tpu.dot_dimension_numbers<[1], [0], [0], [1], [0, 0, 1, 1], [], []>} : vector<64x64xf32>, vector<64x32xf32>, vector<64x32xf32> -> vector<64x32xf32>
    %40 = vector.extract_strided_slice %36 {offsets = [0, 0], sizes = [64, 1], strides = [1, 1]} : vector<128x1xf32> to vector<64x1xf32>
    %41 = vector.broadcast %40 : vector<64x1xf32> to vector<64x32xf32>
    %42 = arith.mulf %39, %41 : vector<64x32xf32>
    %43 = vector.extract_strided_slice %33 {offsets = [64, 0], sizes = [64, 64], strides = [1, 1]} : vector<128x64xf32> to vector<64x64xf32>
    %44 = vector.extract_strided_slice %5 {offsets = [0, 32], sizes = [64, 32], strides = [1, 1]} : vector<64x64xf32> to vector<64x32xf32>
    %cst_13 = arith.constant dense<0.000000e+00> : vector<64x32xf32>
    %45 = tpu.matmul %43, %44, %cst_13 {dimension_numbers = #tpu.dot_dimension_numbers<[1], [0], [0], [1], [0, 0, 1, 1], [], []>} : vector<64x64xf32>, vector<64x32xf32>, vector<64x32xf32> -> vector<64x32xf32>
    %46 = vector.extract_strided_slice %36 {offsets = [64, 0], sizes = [64, 1], strides = [1, 1]} : vector<128x1xf32> to vector<64x1xf32>
    %47 = vector.broadcast %46 : vector<64x1xf32> to vector<64x32xf32>
    %48 = arith.mulf %45, %47 : vector<64x32xf32>
    %49 = tpu.concatenate %42, %48 in 1 : vector<64x32xf32>, vector<64x32xf32> -> vector<64x64xf32>
    %c24 = arith.constant 24 : index
    %c0_14 = arith.constant 0 : index
    %50 = vector.load %arg2[%c24, %c0_14] : memref<240x128xf32, #tpu.memory_space<vmem>>, vector<1x64xf32>
    %51 = vector.broadcast %50 : vector<1x64xf32> to vector<64x64xf32>
    %52 = arith.addf %49, %51 : vector<64x64xf32>
    %cst_15 = arith.constant 0.000000e+00 : f32
    %53 = vector.broadcast %cst_15 : f32 to vector<64x64xf32>
    %54 = arith.cmpf ogt, %52, %53 : vector<64x64xf32>
    %cst_16 = arith.constant 0.000000e+00 : f32
    %55 = vector.broadcast %cst_16 : f32 to vector<64x64xf32>
    %56 = arith.minimumf %52, %55 : vector<64x64xf32>
    %57 = math.exp %56 : vector<64x64xf32>
    %cst_17 = arith.constant 1.000000e+00 : f32
    %58 = vector.broadcast %cst_17 : f32 to vector<64x64xf32>
    %59 = arith.subf %57, %58 : vector<64x64xf32>
    %60 = arith.select %54, %52, %59 : vector<64x64xi1>, vector<64x64xf32>
    %c32 = arith.constant 32 : index
    %c0_18 = arith.constant 0 : index
    %61 = vector.load %arg2[%c32, %c0_18] : memref<240x128xf32, #tpu.memory_space<vmem>>, vector<64x32xf32>
    %cst_19 = arith.constant dense<0.000000e+00> : vector<64x32xf32>
    %62 = tpu.matmul %60, %61, %cst_19 {dimension_numbers = #tpu.dot_dimension_numbers<[1], [0], [0], [1], [0, 0, 1, 1], [], []>} : vector<64x64xf32>, vector<64x32xf32>, vector<64x32xf32> -> vector<64x32xf32>
    %c96 = arith.constant 96 : index
    %c0_20 = arith.constant 0 : index
    %63 = vector.load %arg2[%c96, %c0_20] : memref<240x128xf32, #tpu.memory_space<vmem>>, vector<1x32xf32>
    %c104 = arith.constant 104 : index
    %c0_21 = arith.constant 0 : index
    %64 = vector.load %arg2[%c104, %c0_21] : memref<240x128xf32, #tpu.memory_space<vmem>>, vector<1x32xf32>
    %cst_22 = arith.constant dense<0.000000e+00> : vector<1x64xf32>
    %65 = tpu.matmul %63, %62, %cst_22 {dimension_numbers = #tpu.dot_dimension_numbers<[1], [1], [0], [0], [0, 0, 1, 0], [], []>} : vector<1x32xf32>, vector<64x32xf32>, vector<1x64xf32> -> vector<1x64xf32>
    %cst_23 = arith.constant dense<0.000000e+00> : vector<64x1xf32>
    %66 = tpu.matmul %62, %64, %cst_23 {dimension_numbers = #tpu.dot_dimension_numbers<[1], [1], [0], [0], [0, 0, 1, 0], [], []>} : vector<64x32xf32>, vector<1x32xf32>, vector<64x1xf32> -> vector<64x1xf32>
    %67 = vector.broadcast %66 : vector<64x1xf32> to vector<64x64xf32>
    %68 = vector.broadcast %65 : vector<1x64xf32> to vector<64x64xf32>
    %69 = arith.addf %67, %68 : vector<64x64xf32>
    %cst_24 = arith.constant 0.000000e+00 : f32
    %70 = vector.broadcast %cst_24 : f32 to vector<64x64xf32>
    %71 = arith.cmpf ogt, %69, %70 : vector<64x64xf32>
    %cst_25 = arith.constant 2.000000e-01 : f32
    %72 = vector.broadcast %cst_25 : f32 to vector<64x64xf32>
    %73 = arith.mulf %72, %69 : vector<64x64xf32>
    %74 = arith.select %71, %69, %73 : vector<64x64xi1>, vector<64x64xf32>
    %75 = arith.addf %74, %1 : vector<64x64xf32>
    %cst_26 = arith.constant dense<0xFF800000> : vector<64xf32>
    %76 = vector.multi_reduction <maximumf>, %75, %cst_26 [1] : vector<64x64xf32> to vector<64xf32>
    %77 = vector.shape_cast %76 : vector<64xf32> to vector<64x1xf32>
    %78 = vector.broadcast %77 : vector<64x1xf32> to vector<64x64xf32>
    %79 = arith.subf %75, %78 : vector<64x64xf32>
    %80 = math.exp %79 : vector<64x64xf32>
    %cst_27 = arith.constant dense<0.000000e+00> : vector<64x32xf32>
    %81 = tpu.matmul %80, %62, %cst_27 {dimension_numbers = #tpu.dot_dimension_numbers<[1], [0], [0], [1], [0, 0, 1, 1], [], []>} : vector<64x64xf32>, vector<64x32xf32>, vector<64x32xf32> -> vector<64x32xf32>
    %cst_28 = arith.constant dense<0.000000e+00> : vector<64xf32>
    %82 = vector.multi_reduction <add>, %80, %cst_28 [1] : vector<64x64xf32> to vector<64xf32>
    %83 = vector.shape_cast %82 : vector<64xf32> to vector<64x1xf32>
    %84 = tpu.reciprocal %83 {approx = true} : vector<64x1xf32> -> vector<64x1xf32>
    %85 = vector.broadcast %84 : vector<64x1xf32> to vector<64x32xf32>
    %86 = arith.mulf %81, %85 : vector<64x32xf32>
    %c112 = arith.constant 112 : index
    %c0_29 = arith.constant 0 : index
    %87 = vector.load %arg2[%c112, %c0_29] : memref<240x128xf32, #tpu.memory_space<vmem>>, vector<1x32xf32>
    %88 = vector.broadcast %87 : vector<1x32xf32> to vector<64x32xf32>
    %89 = arith.addf %86, %88 : vector<64x32xf32>
    %cst_30 = arith.constant 0.000000e+00 : f32
    %90 = vector.broadcast %cst_30 : f32 to vector<64x32xf32>
    %91 = arith.cmpf ogt, %89, %90 : vector<64x32xf32>
    %cst_31 = arith.constant 0.000000e+00 : f32
    %92 = vector.broadcast %cst_31 : f32 to vector<64x32xf32>
    %93 = arith.minimumf %89, %92 : vector<64x32xf32>
    %94 = math.exp %93 : vector<64x32xf32>
    %cst_32 = arith.constant 1.000000e+00 : f32
    %95 = vector.broadcast %cst_32 : f32 to vector<64x32xf32>
    %96 = arith.subf %94, %95 : vector<64x32xf32>
    %97 = arith.select %91, %89, %96 : vector<64x32xi1>, vector<64x32xf32>
    %c120 = arith.constant 120 : index
    %c0_33 = arith.constant 0 : index
    %98 = vector.load %arg2[%c120, %c0_33] : memref<240x128xf32, #tpu.memory_space<vmem>>, vector<32x96xf32>
    %cst_34 = arith.constant dense<0.000000e+00> : vector<64x96xf32>
    %99 = tpu.matmul %97, %98, %cst_34 {dimension_numbers = #tpu.dot_dimension_numbers<[1], [0], [0], [1], [0, 0, 1, 1], [], []>} : vector<64x32xf32>, vector<32x96xf32>, vector<64x96xf32> -> vector<64x96xf32>
    %c184 = arith.constant 184 : index
    %c0_35 = arith.constant 0 : index
    %100 = vector.load %arg2[%c184, %c0_35] : memref<240x128xf32, #tpu.memory_space<vmem>>, vector<1x96xf32>
    %101 = vector.broadcast %100 : vector<1x96xf32> to vector<64x96xf32>
    %102 = arith.addf %99, %101 : vector<64x96xf32>
    %c152 = arith.constant 152 : index
    %c0_36 = arith.constant 0 : index
    %103 = vector.load %arg2[%c152, %c0_36] : memref<240x128xf32, #tpu.memory_space<vmem>>, vector<32x96xf32>
    %c192 = arith.constant 192 : index
    %c0_37 = arith.constant 0 : index
    %104 = vector.load %arg2[%c192, %c0_37] : memref<240x128xf32, #tpu.memory_space<vmem>>, vector<1x96xf32>
    %cst_38 = arith.constant 0.000000e+00 : f32
    %105 = vector.broadcast %cst_38 : f32 to vector<8x32xf32>
    %106 = vector.extract_strided_slice %102 {offsets = [0, 0], sizes = [8, 96], strides = [1, 1]} : vector<64x96xf32> to vector<8x96xf32>
    %cst_39 = arith.constant dense<0.000000e+00> : vector<8x96xf32>
    %107 = tpu.matmul %105, %103, %cst_39 {dimension_numbers = #tpu.dot_dimension_numbers<[1], [0], [0], [1], [0, 0, 1, 1], [], []>} : vector<8x32xf32>, vector<32x96xf32>, vector<8x96xf32> -> vector<8x96xf32>
    %108 = vector.broadcast %104 : vector<1x96xf32> to vector<8x96xf32>
    %109 = arith.addf %107, %108 : vector<8x96xf32>
    %110 = vector.extract_strided_slice %106 {offsets = [0, 0], sizes = [8, 64], strides = [1, 1]} : vector<8x96xf32> to vector<8x64xf32>
    %111 = vector.extract_strided_slice %109 {offsets = [0, 0], sizes = [8, 64], strides = [1, 1]} : vector<8x96xf32> to vector<8x64xf32>
    %112 = arith.addf %110, %111 : vector<8x64xf32>
    %cst_40 = arith.constant 5.000000e-01 : f32
    %113 = vector.broadcast %cst_40 : f32 to vector<8x64xf32>
    %114 = arith.mulf %113, %112 : vector<8x64xf32>
    %115 = math.tanh %114 : vector<8x64xf32>
    %cst_41 = arith.constant 1.000000e+00 : f32
    %116 = vector.broadcast %cst_41 : f32 to vector<8x64xf32>
    %117 = arith.addf %115, %116 : vector<8x64xf32>
    %cst_42 = arith.constant 5.000000e-01 : f32
    %118 = vector.broadcast %cst_42 : f32 to vector<8x64xf32>
    %119 = arith.mulf %118, %117 : vector<8x64xf32>
    %120 = vector.extract_strided_slice %119 {offsets = [0, 0], sizes = [8, 32], strides = [1, 1]} : vector<8x64xf32> to vector<8x32xf32>
    %121 = vector.extract_strided_slice %119 {offsets = [0, 32], sizes = [8, 32], strides = [1, 1]} : vector<8x64xf32> to vector<8x32xf32>
    %122 = vector.extract_strided_slice %106 {offsets = [0, 64], sizes = [8, 32], strides = [1, 1]} : vector<8x96xf32> to vector<8x32xf32>
    %123 = vector.extract_strided_slice %109 {offsets = [0, 64], sizes = [8, 32], strides = [1, 1]} : vector<8x96xf32> to vector<8x32xf32>
    %124 = arith.mulf %120, %123 : vector<8x32xf32>
    %125 = arith.addf %122, %124 : vector<8x32xf32>
    %126 = math.tanh %125 : vector<8x32xf32>
    %127 = arith.subf %105, %126 : vector<8x32xf32>
    %128 = arith.mulf %121, %127 : vector<8x32xf32>
    %129 = arith.addf %126, %128 : vector<8x32xf32>
    %130 = vector.extract_strided_slice %102 {offsets = [8, 0], sizes = [8, 96], strides = [1, 1]} : vector<64x96xf32> to vector<8x96xf32>
    %cst_43 = arith.constant dense<0.000000e+00> : vector<8x96xf32>
    %131 = tpu.matmul %129, %103, %cst_43 {dimension_numbers = #tpu.dot_dimension_numbers<[1], [0], [0], [1], [0, 0, 1, 1], [], []>} : vector<8x32xf32>, vector<32x96xf32>, vector<8x96xf32> -> vector<8x96xf32>
    %132 = vector.broadcast %104 : vector<1x96xf32> to vector<8x96xf32>
    %133 = arith.addf %131, %132 : vector<8x96xf32>
    %134 = vector.extract_strided_slice %130 {offsets = [0, 0], sizes = [8, 64], strides = [1, 1]} : vector<8x96xf32> to vector<8x64xf32>
    %135 = vector.extract_strided_slice %133 {offsets = [0, 0], sizes = [8, 64], strides = [1, 1]} : vector<8x96xf32> to vector<8x64xf32>
    %136 = arith.addf %134, %135 : vector<8x64xf32>
    %cst_44 = arith.constant 5.000000e-01 : f32
    %137 = vector.broadcast %cst_44 : f32 to vector<8x64xf32>
    %138 = arith.mulf %137, %136 : vector<8x64xf32>
    %139 = math.tanh %138 : vector<8x64xf32>
    %cst_45 = arith.constant 1.000000e+00 : f32
    %140 = vector.broadcast %cst_45 : f32 to vector<8x64xf32>
    %141 = arith.addf %139, %140 : vector<8x64xf32>
    %cst_46 = arith.constant 5.000000e-01 : f32
    %142 = vector.broadcast %cst_46 : f32 to vector<8x64xf32>
    %143 = arith.mulf %142, %141 : vector<8x64xf32>
    %144 = vector.extract_strided_slice %143 {offsets = [0, 0], sizes = [8, 32], strides = [1, 1]} : vector<8x64xf32> to vector<8x32xf32>
    %145 = vector.extract_strided_slice %143 {offsets = [0, 32], sizes = [8, 32], strides = [1, 1]} : vector<8x64xf32> to vector<8x32xf32>
    %146 = vector.extract_strided_slice %130 {offsets = [0, 64], sizes = [8, 32], strides = [1, 1]} : vector<8x96xf32> to vector<8x32xf32>
    %147 = vector.extract_strided_slice %133 {offsets = [0, 64], sizes = [8, 32], strides = [1, 1]} : vector<8x96xf32> to vector<8x32xf32>
    %148 = arith.mulf %144, %147 : vector<8x32xf32>
    %149 = arith.addf %146, %148 : vector<8x32xf32>
    %150 = math.tanh %149 : vector<8x32xf32>
    %151 = arith.subf %129, %150 : vector<8x32xf32>
    %152 = arith.mulf %145, %151 : vector<8x32xf32>
    %153 = arith.addf %150, %152 : vector<8x32xf32>
    %154 = vector.extract_strided_slice %102 {offsets = [16, 0], sizes = [8, 96], strides = [1, 1]} : vector<64x96xf32> to vector<8x96xf32>
    %cst_47 = arith.constant dense<0.000000e+00> : vector<8x96xf32>
    %155 = tpu.matmul %153, %103, %cst_47 {dimension_numbers = #tpu.dot_dimension_numbers<[1], [0], [0], [1], [0, 0, 1, 1], [], []>} : vector<8x32xf32>, vector<32x96xf32>, vector<8x96xf32> -> vector<8x96xf32>
    %156 = vector.broadcast %104 : vector<1x96xf32> to vector<8x96xf32>
    %157 = arith.addf %155, %156 : vector<8x96xf32>
    %158 = vector.extract_strided_slice %154 {offsets = [0, 0], sizes = [8, 64], strides = [1, 1]} : vector<8x96xf32> to vector<8x64xf32>
    %159 = vector.extract_strided_slice %157 {offsets = [0, 0], sizes = [8, 64], strides = [1, 1]} : vector<8x96xf32> to vector<8x64xf32>
    %160 = arith.addf %158, %159 : vector<8x64xf32>
    %cst_48 = arith.constant 5.000000e-01 : f32
    %161 = vector.broadcast %cst_48 : f32 to vector<8x64xf32>
    %162 = arith.mulf %161, %160 : vector<8x64xf32>
    %163 = math.tanh %162 : vector<8x64xf32>
    %cst_49 = arith.constant 1.000000e+00 : f32
    %164 = vector.broadcast %cst_49 : f32 to vector<8x64xf32>
    %165 = arith.addf %163, %164 : vector<8x64xf32>
    %cst_50 = arith.constant 5.000000e-01 : f32
    %166 = vector.broadcast %cst_50 : f32 to vector<8x64xf32>
    %167 = arith.mulf %166, %165 : vector<8x64xf32>
    %168 = vector.extract_strided_slice %167 {offsets = [0, 0], sizes = [8, 32], strides = [1, 1]} : vector<8x64xf32> to vector<8x32xf32>
    %169 = vector.extract_strided_slice %167 {offsets = [0, 32], sizes = [8, 32], strides = [1, 1]} : vector<8x64xf32> to vector<8x32xf32>
    %170 = vector.extract_strided_slice %154 {offsets = [0, 64], sizes = [8, 32], strides = [1, 1]} : vector<8x96xf32> to vector<8x32xf32>
    %171 = vector.extract_strided_slice %157 {offsets = [0, 64], sizes = [8, 32], strides = [1, 1]} : vector<8x96xf32> to vector<8x32xf32>
    %172 = arith.mulf %168, %171 : vector<8x32xf32>
    %173 = arith.addf %170, %172 : vector<8x32xf32>
    %174 = math.tanh %173 : vector<8x32xf32>
    %175 = arith.subf %153, %174 : vector<8x32xf32>
    %176 = arith.mulf %169, %175 : vector<8x32xf32>
    %177 = arith.addf %174, %176 : vector<8x32xf32>
    %178 = vector.extract_strided_slice %102 {offsets = [24, 0], sizes = [8, 96], strides = [1, 1]} : vector<64x96xf32> to vector<8x96xf32>
    %cst_51 = arith.constant dense<0.000000e+00> : vector<8x96xf32>
    %179 = tpu.matmul %177, %103, %cst_51 {dimension_numbers = #tpu.dot_dimension_numbers<[1], [0], [0], [1], [0, 0, 1, 1], [], []>} : vector<8x32xf32>, vector<32x96xf32>, vector<8x96xf32> -> vector<8x96xf32>
    %180 = vector.broadcast %104 : vector<1x96xf32> to vector<8x96xf32>
    %181 = arith.addf %179, %180 : vector<8x96xf32>
    %182 = vector.extract_strided_slice %178 {offsets = [0, 0], sizes = [8, 64], strides = [1, 1]} : vector<8x96xf32> to vector<8x64xf32>
    %183 = vector.extract_strided_slice %181 {offsets = [0, 0], sizes = [8, 64], strides = [1, 1]} : vector<8x96xf32> to vector<8x64xf32>
    %184 = arith.addf %182, %183 : vector<8x64xf32>
    %cst_52 = arith.constant 5.000000e-01 : f32
    %185 = vector.broadcast %cst_52 : f32 to vector<8x64xf32>
    %186 = arith.mulf %185, %184 : vector<8x64xf32>
    %187 = math.tanh %186 : vector<8x64xf32>
    %cst_53 = arith.constant 1.000000e+00 : f32
    %188 = vector.broadcast %cst_53 : f32 to vector<8x64xf32>
    %189 = arith.addf %187, %188 : vector<8x64xf32>
    %cst_54 = arith.constant 5.000000e-01 : f32
    %190 = vector.broadcast %cst_54 : f32 to vector<8x64xf32>
    %191 = arith.mulf %190, %189 : vector<8x64xf32>
    %192 = vector.extract_strided_slice %191 {offsets = [0, 0], sizes = [8, 32], strides = [1, 1]} : vector<8x64xf32> to vector<8x32xf32>
    %193 = vector.extract_strided_slice %191 {offsets = [0, 32], sizes = [8, 32], strides = [1, 1]} : vector<8x64xf32> to vector<8x32xf32>
    %194 = vector.extract_strided_slice %178 {offsets = [0, 64], sizes = [8, 32], strides = [1, 1]} : vector<8x96xf32> to vector<8x32xf32>
    %195 = vector.extract_strided_slice %181 {offsets = [0, 64], sizes = [8, 32], strides = [1, 1]} : vector<8x96xf32> to vector<8x32xf32>
    %196 = arith.mulf %192, %195 : vector<8x32xf32>
    %197 = arith.addf %194, %196 : vector<8x32xf32>
    %198 = math.tanh %197 : vector<8x32xf32>
    %199 = arith.subf %177, %198 : vector<8x32xf32>
    %200 = arith.mulf %193, %199 : vector<8x32xf32>
    %201 = arith.addf %198, %200 : vector<8x32xf32>
    %202 = vector.extract_strided_slice %102 {offsets = [32, 0], sizes = [8, 96], strides = [1, 1]} : vector<64x96xf32> to vector<8x96xf32>
    %cst_55 = arith.constant dense<0.000000e+00> : vector<8x96xf32>
    %203 = tpu.matmul %201, %103, %cst_55 {dimension_numbers = #tpu.dot_dimension_numbers<[1], [0], [0], [1], [0, 0, 1, 1], [], []>} : vector<8x32xf32>, vector<32x96xf32>, vector<8x96xf32> -> vector<8x96xf32>
    %204 = vector.broadcast %104 : vector<1x96xf32> to vector<8x96xf32>
    %205 = arith.addf %203, %204 : vector<8x96xf32>
    %206 = vector.extract_strided_slice %202 {offsets = [0, 0], sizes = [8, 64], strides = [1, 1]} : vector<8x96xf32> to vector<8x64xf32>
    %207 = vector.extract_strided_slice %205 {offsets = [0, 0], sizes = [8, 64], strides = [1, 1]} : vector<8x96xf32> to vector<8x64xf32>
    %208 = arith.addf %206, %207 : vector<8x64xf32>
    %cst_56 = arith.constant 5.000000e-01 : f32
    %209 = vector.broadcast %cst_56 : f32 to vector<8x64xf32>
    %210 = arith.mulf %209, %208 : vector<8x64xf32>
    %211 = math.tanh %210 : vector<8x64xf32>
    %cst_57 = arith.constant 1.000000e+00 : f32
    %212 = vector.broadcast %cst_57 : f32 to vector<8x64xf32>
    %213 = arith.addf %211, %212 : vector<8x64xf32>
    %cst_58 = arith.constant 5.000000e-01 : f32
    %214 = vector.broadcast %cst_58 : f32 to vector<8x64xf32>
    %215 = arith.mulf %214, %213 : vector<8x64xf32>
    %216 = vector.extract_strided_slice %215 {offsets = [0, 0], sizes = [8, 32], strides = [1, 1]} : vector<8x64xf32> to vector<8x32xf32>
    %217 = vector.extract_strided_slice %215 {offsets = [0, 32], sizes = [8, 32], strides = [1, 1]} : vector<8x64xf32> to vector<8x32xf32>
    %218 = vector.extract_strided_slice %202 {offsets = [0, 64], sizes = [8, 32], strides = [1, 1]} : vector<8x96xf32> to vector<8x32xf32>
    %219 = vector.extract_strided_slice %205 {offsets = [0, 64], sizes = [8, 32], strides = [1, 1]} : vector<8x96xf32> to vector<8x32xf32>
    %220 = arith.mulf %216, %219 : vector<8x32xf32>
    %221 = arith.addf %218, %220 : vector<8x32xf32>
    %222 = math.tanh %221 : vector<8x32xf32>
    %223 = arith.subf %201, %222 : vector<8x32xf32>
    %224 = arith.mulf %217, %223 : vector<8x32xf32>
    %225 = arith.addf %222, %224 : vector<8x32xf32>
    %226 = vector.extract_strided_slice %102 {offsets = [40, 0], sizes = [8, 96], strides = [1, 1]} : vector<64x96xf32> to vector<8x96xf32>
    %cst_59 = arith.constant dense<0.000000e+00> : vector<8x96xf32>
    %227 = tpu.matmul %225, %103, %cst_59 {dimension_numbers = #tpu.dot_dimension_numbers<[1], [0], [0], [1], [0, 0, 1, 1], [], []>} : vector<8x32xf32>, vector<32x96xf32>, vector<8x96xf32> -> vector<8x96xf32>
    %228 = vector.broadcast %104 : vector<1x96xf32> to vector<8x96xf32>
    %229 = arith.addf %227, %228 : vector<8x96xf32>
    %230 = vector.extract_strided_slice %226 {offsets = [0, 0], sizes = [8, 64], strides = [1, 1]} : vector<8x96xf32> to vector<8x64xf32>
    %231 = vector.extract_strided_slice %229 {offsets = [0, 0], sizes = [8, 64], strides = [1, 1]} : vector<8x96xf32> to vector<8x64xf32>
    %232 = arith.addf %230, %231 : vector<8x64xf32>
    %cst_60 = arith.constant 5.000000e-01 : f32
    %233 = vector.broadcast %cst_60 : f32 to vector<8x64xf32>
    %234 = arith.mulf %233, %232 : vector<8x64xf32>
    %235 = math.tanh %234 : vector<8x64xf32>
    %cst_61 = arith.constant 1.000000e+00 : f32
    %236 = vector.broadcast %cst_61 : f32 to vector<8x64xf32>
    %237 = arith.addf %235, %236 : vector<8x64xf32>
    %cst_62 = arith.constant 5.000000e-01 : f32
    %238 = vector.broadcast %cst_62 : f32 to vector<8x64xf32>
    %239 = arith.mulf %238, %237 : vector<8x64xf32>
    %240 = vector.extract_strided_slice %239 {offsets = [0, 0], sizes = [8, 32], strides = [1, 1]} : vector<8x64xf32> to vector<8x32xf32>
    %241 = vector.extract_strided_slice %239 {offsets = [0, 32], sizes = [8, 32], strides = [1, 1]} : vector<8x64xf32> to vector<8x32xf32>
    %242 = vector.extract_strided_slice %226 {offsets = [0, 64], sizes = [8, 32], strides = [1, 1]} : vector<8x96xf32> to vector<8x32xf32>
    %243 = vector.extract_strided_slice %229 {offsets = [0, 64], sizes = [8, 32], strides = [1, 1]} : vector<8x96xf32> to vector<8x32xf32>
    %244 = arith.mulf %240, %243 : vector<8x32xf32>
    %245 = arith.addf %242, %244 : vector<8x32xf32>
    %246 = math.tanh %245 : vector<8x32xf32>
    %247 = arith.subf %225, %246 : vector<8x32xf32>
    %248 = arith.mulf %241, %247 : vector<8x32xf32>
    %249 = arith.addf %246, %248 : vector<8x32xf32>
    %250 = vector.extract_strided_slice %102 {offsets = [48, 0], sizes = [8, 96], strides = [1, 1]} : vector<64x96xf32> to vector<8x96xf32>
    %cst_63 = arith.constant dense<0.000000e+00> : vector<8x96xf32>
    %251 = tpu.matmul %249, %103, %cst_63 {dimension_numbers = #tpu.dot_dimension_numbers<[1], [0], [0], [1], [0, 0, 1, 1], [], []>} : vector<8x32xf32>, vector<32x96xf32>, vector<8x96xf32> -> vector<8x96xf32>
    %252 = vector.broadcast %104 : vector<1x96xf32> to vector<8x96xf32>
    %253 = arith.addf %251, %252 : vector<8x96xf32>
    %254 = vector.extract_strided_slice %250 {offsets = [0, 0], sizes = [8, 64], strides = [1, 1]} : vector<8x96xf32> to vector<8x64xf32>
    %255 = vector.extract_strided_slice %253 {offsets = [0, 0], sizes = [8, 64], strides = [1, 1]} : vector<8x96xf32> to vector<8x64xf32>
    %256 = arith.addf %254, %255 : vector<8x64xf32>
    %cst_64 = arith.constant 5.000000e-01 : f32
    %257 = vector.broadcast %cst_64 : f32 to vector<8x64xf32>
    %258 = arith.mulf %257, %256 : vector<8x64xf32>
    %259 = math.tanh %258 : vector<8x64xf32>
    %cst_65 = arith.constant 1.000000e+00 : f32
    %260 = vector.broadcast %cst_65 : f32 to vector<8x64xf32>
    %261 = arith.addf %259, %260 : vector<8x64xf32>
    %cst_66 = arith.constant 5.000000e-01 : f32
    %262 = vector.broadcast %cst_66 : f32 to vector<8x64xf32>
    %263 = arith.mulf %262, %261 : vector<8x64xf32>
    %264 = vector.extract_strided_slice %263 {offsets = [0, 0], sizes = [8, 32], strides = [1, 1]} : vector<8x64xf32> to vector<8x32xf32>
    %265 = vector.extract_strided_slice %263 {offsets = [0, 32], sizes = [8, 32], strides = [1, 1]} : vector<8x64xf32> to vector<8x32xf32>
    %266 = vector.extract_strided_slice %250 {offsets = [0, 64], sizes = [8, 32], strides = [1, 1]} : vector<8x96xf32> to vector<8x32xf32>
    %267 = vector.extract_strided_slice %253 {offsets = [0, 64], sizes = [8, 32], strides = [1, 1]} : vector<8x96xf32> to vector<8x32xf32>
    %268 = arith.mulf %264, %267 : vector<8x32xf32>
    %269 = arith.addf %266, %268 : vector<8x32xf32>
    %270 = math.tanh %269 : vector<8x32xf32>
    %271 = arith.subf %249, %270 : vector<8x32xf32>
    %272 = arith.mulf %265, %271 : vector<8x32xf32>
    %273 = arith.addf %270, %272 : vector<8x32xf32>
    %274 = vector.extract_strided_slice %102 {offsets = [56, 0], sizes = [8, 96], strides = [1, 1]} : vector<64x96xf32> to vector<8x96xf32>
    %cst_67 = arith.constant dense<0.000000e+00> : vector<8x96xf32>
    %275 = tpu.matmul %273, %103, %cst_67 {dimension_numbers = #tpu.dot_dimension_numbers<[1], [0], [0], [1], [0, 0, 1, 1], [], []>} : vector<8x32xf32>, vector<32x96xf32>, vector<8x96xf32> -> vector<8x96xf32>
    %276 = vector.broadcast %104 : vector<1x96xf32> to vector<8x96xf32>
    %277 = arith.addf %275, %276 : vector<8x96xf32>
    %278 = vector.extract_strided_slice %274 {offsets = [0, 0], sizes = [8, 64], strides = [1, 1]} : vector<8x96xf32> to vector<8x64xf32>
    %279 = vector.extract_strided_slice %277 {offsets = [0, 0], sizes = [8, 64], strides = [1, 1]} : vector<8x96xf32> to vector<8x64xf32>
    %280 = arith.addf %278, %279 : vector<8x64xf32>
    %cst_68 = arith.constant 5.000000e-01 : f32
    %281 = vector.broadcast %cst_68 : f32 to vector<8x64xf32>
    %282 = arith.mulf %281, %280 : vector<8x64xf32>
    %283 = math.tanh %282 : vector<8x64xf32>
    %cst_69 = arith.constant 1.000000e+00 : f32
    %284 = vector.broadcast %cst_69 : f32 to vector<8x64xf32>
    %285 = arith.addf %283, %284 : vector<8x64xf32>
    %cst_70 = arith.constant 5.000000e-01 : f32
    %286 = vector.broadcast %cst_70 : f32 to vector<8x64xf32>
    %287 = arith.mulf %286, %285 : vector<8x64xf32>
    %288 = vector.extract_strided_slice %287 {offsets = [0, 0], sizes = [8, 32], strides = [1, 1]} : vector<8x64xf32> to vector<8x32xf32>
    %289 = vector.extract_strided_slice %287 {offsets = [0, 32], sizes = [8, 32], strides = [1, 1]} : vector<8x64xf32> to vector<8x32xf32>
    %290 = vector.extract_strided_slice %274 {offsets = [0, 64], sizes = [8, 32], strides = [1, 1]} : vector<8x96xf32> to vector<8x32xf32>
    %291 = vector.extract_strided_slice %277 {offsets = [0, 64], sizes = [8, 32], strides = [1, 1]} : vector<8x96xf32> to vector<8x32xf32>
    %292 = arith.mulf %288, %291 : vector<8x32xf32>
    %293 = arith.addf %290, %292 : vector<8x32xf32>
    %294 = math.tanh %293 : vector<8x32xf32>
    %295 = arith.subf %273, %294 : vector<8x32xf32>
    %296 = arith.mulf %289, %295 : vector<8x32xf32>
    %297 = arith.addf %294, %296 : vector<8x32xf32>
    %c200 = arith.constant 200 : index
    %c0_71 = arith.constant 0 : index
    %298 = vector.load %arg2[%c200, %c0_71] : memref<240x128xf32, #tpu.memory_space<vmem>>, vector<32x128xf32>
    %c232 = arith.constant 232 : index
    %c0_72 = arith.constant 0 : index
    %299 = vector.load %arg2[%c232, %c0_72] : memref<240x128xf32, #tpu.memory_space<vmem>>, vector<1x128xf32>
    %cst_73 = arith.constant dense<0.000000e+00> : vector<8x128xf32>
    %300 = tpu.matmul %297, %298, %cst_73 {dimension_numbers = #tpu.dot_dimension_numbers<[1], [0], [0], [1], [0, 0, 1, 1], [], []>} : vector<8x32xf32>, vector<32x128xf32>, vector<8x128xf32> -> vector<8x128xf32>
    %301 = vector.broadcast %299 : vector<1x128xf32> to vector<8x128xf32>
    %302 = arith.addf %300, %301 : vector<8x128xf32>
    %c0_74 = arith.constant 0 : index
    %c0_75 = arith.constant 0 : index
    %303 = vector.load %arg3[%c0_74, %c0_75] : memref<8x128xf32, #tpu.memory_space<vmem>>, vector<8x128xf32>
    tpu.vector_store %arg3[%c0_74, %c0_75], %302 {strides = array<i32>} : memref<8x128xf32, #tpu.memory_space<vmem>>, vector<8x128xf32>,
    return
  }
}

</mosaic_0001>

<llo_original>
// kernel: tpu_custom_call.1
$region0: #{tpu_custom_call.1}
  #allocation0 [shape = 'u32[]', space=smem, size = 0x4, offset = 0x4, fixed_abs, tag = 'smem constant byte address 0x4 - core index']
  #allocation1 [shape = 'u32[144,128]{1,0:T(1,128)}', space=vmem, size = 0x12000, scoped, tag = 'internal scratch']
  %s0 = inlined_call_operand.vmem [shape: f32[64,1], index: 0, kind: input, shape index: {}]
  %s1 = inlined_call_operand.vmem [shape: f32[64,64], index: 1, kind: input, shape index: {}]
  %s2 = inlined_call_operand.hbm [shape: f32[240,128], index: 2, kind: input, shape index: {}]
  %s3 = inlined_call_operand.hbm [shape: f32[8,128], index: 3, kind: output, shape index: {}]
  %s4 = sld [smem:[#allocation0]]
  $region26: #{tpu_custom_call.1} parent=0
    _
  %s6 = ssub.s32 1, %s4
  %s7 = scalar_select 0, %s6, %s4
  $region1: #{tpu_custom_call.1} parent=0
    #allocation2 [shape = 'u8[122880]{0}', space=vmem, size = 0x1e000, scoped, tag = 'input window, operand 2, single buffered']
    #allocation3 [shape = 's32[1]{0}', space=sflag, size = 0x4, scoped, tag = 'scoped memory for tpu_custom_call.1']
    #allocation4 [shape = 's32[1]{0}', space=sflag, size = 0x4, scoped, tag = 'scoped memory for tpu_custom_call.1']
    #allocation5 [shape = 'u8[4096]{0}', space=vmem, size = 0x1000, scoped, tag = 'output window, operand 0, single buffered']
    %8 = vsyncpa [#allocation3], 0
    %9 = vsyncpa [#allocation4], 0
    // Predicated region
    $region2: #{tpu_custom_call.1} parent=1 // pred_check
      _
    $region3: #{tpu_custom_call.1} parent=1 // pred_check_branch
      %11 = sbr.rel (0) target = $region5
    $region4: #{tpu_custom_call.1} parent=1 // pred_region
      _
    $region5: #{tpu_custom_call.1} parent=1 // pred_fallthru
      _
    // Predicated region
    $region6: #{tpu_custom_call.1} parent=1 // pred_check
      _
    $region7: #{tpu_custom_call.1} parent=1 // pred_check_branch
      %13 = sbr.rel (0) target = $region9
    $region8: #{tpu_custom_call.1} parent=1 // pred_region
      _
    $region9: #{tpu_custom_call.1} parent=1 // pred_fallthru
      _
    // Predicated region
    $region10: #{tpu_custom_call.1} parent=1 // pred_check
      _
    $region11: #{tpu_custom_call.1} parent=1 // pred_check_branch
      %15 = sbr.rel (0) target = $region13
    $region12: #{tpu_custom_call.1} parent=1 // pred_region
      %s17 = ssub.s32 3840, 3840
      %18 = vsyncadd [#allocation3], %s17
      %s19 = sshll.u32 [#allocation2], 4
      %s20 = int_to_ptr.vmem [resolvable:$true] %s19
      %25 = dma.hbm_to_vmem [thread:$0]  %s2, 3840, %s20, [#allocation3], 128, 128, 8
    $region13: #{tpu_custom_call.1} parent=1 // pred_fallthru
      _
    // Predicated region
    $region14: #{tpu_custom_call.1} parent=1 // pred_check
      _
    $region15: #{tpu_custom_call.1} parent=1 // pred_check_branch
      %27 = sbr.rel (0) target = $region17
    $region16: #{tpu_custom_call.1} parent=1 // pred_region
      %28 = dma.done [#allocation3], 3840
    $region17: #{tpu_custom_call.1} parent=1 // pred_fallthru
      _
    %v29 = vld [vmem:[%s0] sm:$0xff]
    %v30 = vld [vmem:[%s0 + $0x8] sm:$0xff]
    %v31 = vld [vmem:[%s0 + $0x10] sm:$0xff]
    %v32 = vld [vmem:[%s0 + $0x18] sm:$0xff]
    %v33 = vld [vmem:[%s0 + $0x20] sm:$0xff]
    %v34 = vld [vmem:[%s0 + $0x28] sm:$0xff]
    %v35 = vld [vmem:[%s0 + $0x30] sm:$0xff]
    %v36 = vld [vmem:[%s0 + $0x38] sm:$0xff]
    %v37 = vld [vmem:[%s1] sm:$0xff]
    %v38 = vld [vmem:[%s1 + $0x8] sm:$0xff]
    %v39 = vld [vmem:[%s1 + $0x10] sm:$0xff]
    %v40 = vld [vmem:[%s1 + $0x18] sm:$0xff]
    %v41 = vld [vmem:[%s1 + $0x20] sm:$0xff]
    %v42 = vld [vmem:[%s1 + $0x28] sm:$0xff]
    %v43 = vld [vmem:[%s1 + $0x30] sm:$0xff]
    %v44 = vld [vmem:[%s1 + $0x38] sm:$0xff]
    %v45 = vld [vmem:[#allocation2] sm:$0x1]
    %47 = vset.pattern.permute.xlu0 0
    %48 = vperm.xlu0 %47, %v29
    %v49 = vpop.permute.xlu0 %48
    %52 = vset.pattern.permute.xlu0 0
    %53 = vperm.xlu0 %52, %v30
    %v54 = vpop.permute.xlu0 %53
    %57 = vset.pattern.permute.xlu0 0
    %58 = vperm.xlu0 %57, %v31
    %v59 = vpop.permute.xlu0 %58
    %62 = vset.pattern.permute.xlu0 0
    %63 = vperm.xlu0 %62, %v32
    %v64 = vpop.permute.xlu0 %63
    %67 = vset.pattern.permute.xlu0 0
    %68 = vperm.xlu0 %67, %v33
    %v69 = vpop.permute.xlu0 %68
    %72 = vset.pattern.permute.xlu0 0
    %73 = vperm.xlu0 %72, %v34
    %v74 = vpop.permute.xlu0 %73
    %77 = vset.pattern.permute.xlu0 0
    %78 = vperm.xlu0 %77, %v35
    %v79 = vpop.permute.xlu0 %78
    %82 = vset.pattern.permute.xlu0 0
    %83 = vperm.xlu0 %82, %v36
    %v84 = vpop.permute.xlu0 %83
    %v86 = vlaneseq
    %v87 = vshrl.u32 %v86, 7
    %v88 = vsub.s32 0, %v87
    %v89 = vrot.slane %v45, %v88
    %v90 = vmul.f32 %v49, %v89
    %v91 = vmul.f32 %v54, %v89
    %v92 = vmul.f32 %v59, %v89
    %v93 = vmul.f32 %v64, %v89
    %v94 = vmul.f32 %v69, %v89
    %v95 = vmul.f32 %v74, %v89
    %v96 = vmul.f32 %v79, %v89
    %v97 = vmul.f32 %v84, %v89
    %v98 = vld [vmem:[#allocation2 + $0x8] sm:$0x3]
    %v99 = vld [vmem:[#allocation2 + $0x10] sm:$0x3]
    %vm100 = vcmask 523264
    %v102 = vsel %vm100, %v98, 0
    %v105 = vsel %vm100, %v90, 0
    %v108 = vsel %vm100, %v91, 0
    %v111 = vsel %vm100, %v92, 0
    %v114 = vsel %vm100, %v93, 0
    %v117 = vsel %vm100, %v94, 0
    %v120 = vsel %vm100, %v95, 0
    %v123 = vsel %vm100, %v96, 0
    %v126 = vsel %vm100, %v97, 0
    %128 = vmatprep.subr.mxu0 0.0
    %129 = vmatpush1.xpose.msra.mxu0 0.0
    %130 = vmatprep.subr.mxu0 0.0
    %131 = vmatpush1.xpose.msra.mxu0 0.0
    %132 = vmatprep.subr.mxu0 0.0
    %133 = vmatpush1.xpose.msra.mxu0 0.0
    %134 = vmatprep.subr.mxu0 0.0
    %135 = vmatpush1.xpose.msra.mxu0 0.0
    %136 = vmatprep.subr.mxu0 0.0
    %137 = vmatpush1.xpose.msra.mxu0 0.0
    %138 = vmatprep.subr.mxu0 0.0
    %139 = vmatpush1.xpose.msra.mxu0 0.0
    %140 = vmatprep.subr.mxu0 0.0
    %141 = vmatpush1.xpose.msra.mxu0 0.0
    %142 = vmatprep.subr.mxu0 0.0
    %143 = vmatpush1.xpose.msra.mxu0 0.0
    %144 = vmatprep.subr.mxu0 0.0
    %145 = vmatpush1.xpose.msra.mxu0 %v126
    %146 = vmatprep.subr.mxu0 0.0
    %147 = vmatpush1.xpose.msra.mxu0 %v123
    %148 = vmatprep.subr.mxu0 0.0
    %149 = vmatpush1.xpose.msra.mxu0 %v120
    %150 = vmatprep.subr.mxu0 0.0
    %151 = vmatpush1.xpose.msra.mxu0 %v117
    %152 = vmatprep.subr.mxu0 0.0
    %153 = vmatpush1.xpose.msra.mxu0 %v114
    %154 = vmatprep.subr.mxu0 0.0
    %155 = vmatpush1.xpose.msra.mxu0 %v111
    %156 = vmatprep.subr.mxu0 0.0
    %157 = vmatpush1.xpose.msra.mxu0 %v108
    %158 = vmatprep.subr.mxu0 0.0
    %159 = vmatpush1.xpose.msra.mxu0 %v105
    %160 = vmatprep.subr.mxu0 0.0
    %161 = vmatpush2.xpose.msra.mxu0 0.0
    %162 = vmatprep.subr.mxu0 0.0
    %163 = vmatpush2.xpose.msra.mxu0 0.0
    %164 = vmatprep.subr.mxu0 0.0
    %165 = vmatpush2.xpose.msra.mxu0 0.0
    %166 = vmatprep.subr.mxu0 0.0
    %167 = vmatpush2.xpose.msra.mxu0 0.0
    %168 = vmatprep.subr.mxu0 0.0
    %169 = vmatpush2.xpose.msra.mxu0 0.0
    %170 = vmatprep.subr.mxu0 0.0
    %171 = vmatpush2.xpose.msra.mxu0 0.0
    %172 = vmatprep.subr.mxu0 0.0
    %173 = vmatpush2.xpose.msra.mxu0 0.0
    %174 = vmatprep.subr.mxu0 0.0
    %175 = vmatpush2.xpose.msra.mxu0 0.0
    %176 = vmatprep.subr.mxu0 0.0
    %177 = vmatpush2.xpose.msra.mxu0 0.0
    %178 = vmatprep.subr.mxu0 0.0
    %179 = vmatpush2.xpose.msra.mxu0 0.0
    %180 = vmatprep.subr.mxu0 0.0
    %181 = vmatpush2.xpose.msra.mxu0 0.0
    %182 = vmatprep.subr.mxu0 0.0
    %183 = vmatpush2.xpose.msra.mxu0 0.0
    %184 = vmatprep.subr.mxu0 0.0
    %185 = vmatpush2.xpose.msra.mxu0 0.0
    %186 = vmatprep.subr.mxu0 0.0
    %187 = vmatpush2.xpose.msra.mxu0 0.0
    %188 = vmatprep.subr.mxu0 0.0
    %189 = vmatpush2.xpose.msra.mxu0 0.0
    %190 = vmatprep.subr.mxu0 0.0
    %191 = vmatpush2.xpose.msra.mxu0 0.0
    %192 = vmatprep.mubr.f32.mxu0 0.0
    %193 = vmatmul.mubr.f32.gmra.mxu0 %v102
    %v194 = vpop.f32.mrf.mxu0
    %v195 = vadd.f32 0.0, %v194
    %v196 = vpop.f32.mrf.mxu0
    %197 = vdwg.mxu0
    %v199 = vsel %vm100, %v99, 0
    %201 = vmatprep.subr.mxu0 0.0
    %202 = vmatpush1.xpose.msra.mxu0 0.0
    %203 = vmatprep.subr.mxu0 0.0
    %204 = vmatpush1.xpose.msra.mxu0 0.0
    %205 = vmatprep.subr.mxu0 0.0
    %206 = vmatpush1.xpose.msra.mxu0 0.0
    %207 = vmatprep.subr.mxu0 0.0
    %208 = vmatpush1.xpose.msra.mxu0 0.0
    %209 = vmatprep.subr.mxu0 0.0
    %210 = vmatpush1.xpose.msra.mxu0 0.0
    %211 = vmatprep.subr.mxu0 0.0
    %212 = vmatpush1.xpose.msra.mxu0 0.0
    %213 = vmatprep.subr.mxu0 0.0
    %214 = vmatpush1.xpose.msra.mxu0 0.0
    %215 = vmatprep.subr.mxu0 0.0
    %216 = vmatpush1.xpose.msra.mxu0 0.0
    %217 = vmatprep.subr.mxu0 0.0
    %218 = vmatpush1.xpose.msra.mxu0 0.0
    %219 = vmatprep.subr.mxu0 0.0
    %220 = vmatpush1.xpose.msra.mxu0 0.0
    %221 = vmatprep.subr.mxu0 0.0
    %222 = vmatpush1.xpose.msra.mxu0 0.0
    %223 = vmatprep.subr.mxu0 0.0
    %224 = vmatpush1.xpose.msra.mxu0 0.0
    %225 = vmatprep.subr.mxu0 0.0
    %226 = vmatpush1.xpose.msra.mxu0 0.0
    %227 = vmatprep.subr.mxu0 0.0
    %228 = vmatpush1.xpose.msra.mxu0 0.0
    %229 = vmatprep.subr.mxu0 0.0
    %230 = vmatpush1.xpose.msra.mxu0 0.0
    %231 = vmatprep.subr.mxu0 0.0
    %232 = vmatpush1.xpose.msra.mxu0 %v199
    %233 = vmatprep.subr.mxu0 0.0
    %234 = vmatpush2.xpose.msra.mxu0 0.0
    %235 = vmatprep.subr.mxu0 0.0
    %236 = vmatpush2.xpose.msra.mxu0 0.0
    %237 = vmatprep.subr.mxu0 0.0
    %238 = vmatpush2.xpose.msra.mxu0 0.0
    %239 = vmatprep.subr.mxu0 0.0
    %240 = vmatpush2.xpose.msra.mxu0 0.0
    %241 = vmatprep.subr.mxu0 0.0
    %242 = vmatpush2.xpose.msra.mxu0 0.0
    %243 = vmatprep.subr.mxu0 0.0
    %244 = vmatpush2.xpose.msra.mxu0 0.0
    %245 = vmatprep.subr.mxu0 0.0
    %246 = vmatpush2.xpose.msra.mxu0 0.0
    %247 = vmatprep.subr.mxu0 0.0
    %248 = vmatpush2.xpose.msra.mxu0 0.0
    %249 = vmatprep.subr.mxu0 0.0
    %250 = vmatpush2.xpose.msra.mxu0 0.0
    %251 = vmatprep.subr.mxu0 0.0
    %252 = vmatpush2.xpose.msra.mxu0 0.0
    %253 = vmatprep.subr.mxu0 0.0
    %254 = vmatpush2.xpose.msra.mxu0 0.0
    %255 = vmatprep.subr.mxu0 0.0
    %256 = vmatpush2.xpose.msra.mxu0 0.0
    %257 = vmatprep.subr.mxu0 0.0
    %258 = vmatpush2.xpose.msra.mxu0 0.0
    %259 = vmatprep.subr.mxu0 0.0
    %260 = vmatpush2.xpose.msra.mxu0 0.0
    %261 = vmatprep.subr.mxu0 0.0
    %262 = vmatpush2.xpose.msra.mxu0 0.0
    %263 = vmatprep.subr.mxu0 0.0
    %264 = vmatpush2.xpose.msra.mxu0 0.0
    %265 = vmatprep.mubr.f32.mxu0 0.0
    %266 = vmatmul.mubr.f32.gmra.mxu0 %v105
    %v267 = vpop.f32.mrf.mxu0
    %v268 = vadd.f32 0.0, %v267
    %v269 = vpop.f32.mrf.mxu0
    %270 = vmatprep.mubr.f32.mxu0 0.0
    %271 = vmatmul.mubr.f32.gmra.mxu0 %v108
    %v272 = vpop.f32.mrf.mxu0
    %v273 = vadd.f32 0.0, %v272
    %v274 = vpop.f32.mrf.mxu0
    %275 = vmatprep.mubr.f32.mxu0 0.0
    %276 = vmatmul.mubr.f32.gmra.mxu0 %v111
    %v277 = vpop.f32.mrf.mxu0
    %v278 = vadd.f32 0.0, %v277
    %v279 = vpop.f32.mrf.mxu0
    %280 = vmatprep.mubr.f32.mxu0 0.0
    %281 = vmatmul.mubr.f32.gmra.mxu0 %v114
    %v282 = vpop.f32.mrf.mxu0
    %v283 = vadd.f32 0.0, %v282
    %v284 = vpop.f32.mrf.mxu0
    %285 = vmatprep.mubr.f32.mxu0 0.0
    %286 = vmatmul.mubr.f32.gmra.mxu0 %v117
    %v287 = vpop.f32.mrf.mxu0
    %v288 = vadd.f32 0.0, %v287
    %v289 = vpop.f32.mrf.mxu0
    %290 = vmatprep.mubr.f32.mxu0 0.0
    %291 = vmatmul.mubr.f32.gmra.mxu0 %v120
    %v292 = vpop.f32.mrf.mxu0
    %v293 = vadd.f32 0.0, %v292
    %v294 = vpop.f32.mrf.mxu0
    %295 = vmatprep.mubr.f32.mxu0 0.0
    %296 = vmatmul.mubr.f32.gmra.mxu0 %v123
    %v297 = vpop.f32.mrf.mxu0
    %v298 = vadd.f32 0.0, %v297
    %v299 = vpop.f32.mrf.mxu0
    %300 = vmatprep.mubr.f32.mxu0 0.0
    %301 = vmatmul.mubr.f32.gmra.mxu0 %v126
    %v302 = vpop.f32.mrf.mxu0
    %v303 = vadd.f32 0.0, %v302
    %v304 = vpop.f32.mrf.mxu0
    %305 = vdwg.mxu0
    %314 = vrot.lane.b32.xlu0 %v268, 127
    %v315 = vpop.permute.xlu0 %314
    %316 = vrot.lane.b32.xlu0 %v273, 127
    %v317 = vpop.permute.xlu0 %316
    %318 = vrot.lane.b32.xlu0 %v278, 127
    %v319 = vpop.permute.xlu0 %318
    %320 = vrot.lane.b32.xlu0 %v283, 127
    %v321 = vpop.permute.xlu0 %320
    %322 = vrot.lane.b32.xlu0 %v288, 127
    %v323 = vpop.permute.xlu0 %322
    %324 = vrot.lane.b32.xlu0 %v293, 127
    %v325 = vpop.permute.xlu0 %324
    %326 = vrot.lane.b32.xlu0 %v298, 127
    %v327 = vpop.permute.xlu0 %326
    %328 = vrot.lane.b32.xlu0 %v303, 127
    %v329 = vpop.permute.xlu0 %328
    %v330 = vlaneseq
    %v331 = vshrl.u32 %v330, 7
    %v332 = vsub.s32 0, %v331
    %v333 = vrot.slane %v195, %v332
    %v334 = vlaneseq
    %v335 = vshrl.u32 %v334, 7
    %v336 = vsub.s32 1, %v335
    %v337 = vrot.slane %v195, %v336
    %338 = vset.pattern.permute.xlu0 0
    %339 = vperm.xlu0 %338, %v268
    %v340 = vpop.permute.xlu0 %339
    %342 = vset.pattern.permute.xlu0 0
    %343 = vperm.xlu0 %342, %v273
    %v344 = vpop.permute.xlu0 %343
    %346 = vset.pattern.permute.xlu0 0
    %347 = vperm.xlu0 %346, %v278
    %v348 = vpop.permute.xlu0 %347
    %350 = vset.pattern.permute.xlu0 0
    %351 = vperm.xlu0 %350, %v283
    %v352 = vpop.permute.xlu0 %351
    %354 = vset.pattern.permute.xlu0 0
    %355 = vperm.xlu0 %354, %v288
    %v356 = vpop.permute.xlu0 %355
    %358 = vset.pattern.permute.xlu0 0
    %359 = vperm.xlu0 %358, %v293
    %v360 = vpop.permute.xlu0 %359
    %362 = vset.pattern.permute.xlu0 0
    %363 = vperm.xlu0 %362, %v298
    %v364 = vpop.permute.xlu0 %363
    %366 = vset.pattern.permute.xlu0 0
    %367 = vperm.xlu0 %366, %v303
    %v368 = vpop.permute.xlu0 %367
    %370 = vset.pattern.permute.xlu0 0
    %371 = vperm.xlu0 %370, %v315
    %v372 = vpop.permute.xlu0 %371
    %374 = vset.pattern.permute.xlu0 0
    %375 = vperm.xlu0 %374, %v317
    %v376 = vpop.permute.xlu0 %375
    %378 = vset.pattern.permute.xlu0 0
    %379 = vperm.xlu0 %378, %v319
    %v380 = vpop.permute.xlu0 %379
    %382 = vset.pattern.permute.xlu0 0
    %383 = vperm.xlu0 %382, %v321
    %v384 = vpop.permute.xlu0 %383
    %386 = vset.pattern.permute.xlu0 0
    %387 = vperm.xlu0 %386, %v323
    %v388 = vpop.permute.xlu0 %387
    %390 = vset.pattern.permute.xlu0 0
    %391 = vperm.xlu0 %390, %v325
    %v392 = vpop.permute.xlu0 %391
    %394 = vset.pattern.permute.xlu0 0
    %395 = vperm.xlu0 %394, %v327
    %v396 = vpop.permute.xlu0 %395
    %398 = vset.pattern.permute.xlu0 0
    %399 = vperm.xlu0 %398, %v329
    %v400 = vpop.permute.xlu0 %399
    %v402 = vadd.f32 %v340, %v333
    %v403 = vadd.f32 %v344, %v333
    %v404 = vadd.f32 %v348, %v333
    %v405 = vadd.f32 %v352, %v333
    %v406 = vadd.f32 %v356, %v333
    %v407 = vadd.f32 %v360, %v333
    %v408 = vadd.f32 %v364, %v333
    %v409 = vadd.f32 %v368, %v333
    %v410 = vadd.f32 %v372, %v337
    %v411 = vadd.f32 %v376, %v337
    %v412 = vadd.f32 %v380, %v337
    %v413 = vadd.f32 %v384, %v337
    %v414 = vadd.f32 %v388, %v337
    %v415 = vadd.f32 %v392, %v337
    %v416 = vadd.f32 %v396, %v337
    %v417 = vadd.f32 %v400, %v337
    %vm418 = vcmp.gt.f32.partialorder %v402, 0.0
    %vm419 = vcmp.gt.f32.partialorder %v403, 0.0
    %vm420 = vcmp.gt.f32.partialorder %v404, 0.0
    %vm421 = vcmp.gt.f32.partialorder %v405, 0.0
    %vm422 = vcmp.gt.f32.partialorder %v406, 0.0
    %vm423 = vcmp.gt.f32.partialorder %v407, 0.0
    %vm424 = vcmp.gt.f32.partialorder %v408, 0.0
    %vm425 = vcmp.gt.f32.partialorder %v409, 0.0
    %vm426 = vcmp.gt.f32.partialorder %v410, 0.0
    %vm427 = vcmp.gt.f32.partialorder %v411, 0.0
    %vm428 = vcmp.gt.f32.partialorder %v412, 0.0
    %vm429 = vcmp.gt.f32.partialorder %v413, 0.0
    %vm430 = vcmp.gt.f32.partialorder %v414, 0.0
    %vm431 = vcmp.gt.f32.partialorder %v415, 0.0
    %vm432 = vcmp.gt.f32.partialorder %v416, 0.0
    %vm433 = vcmp.gt.f32.partialorder %v417, 0.0
    %v434 = vmul.f32 %v402, 0.2
    %v435 = vmul.f32 %v403, 0.2
    %v436 = vmul.f32 %v404, 0.2
    %v437 = vmul.f32 %v405, 0.2
    %v438 = vmul.f32 %v406, 0.2
    %v439 = vmul.f32 %v407, 0.2
    %v440 = vmul.f32 %v408, 0.2
    %v441 = vmul.f32 %v409, 0.2
    %v442 = vmul.f32 %v410, 0.2
    %v443 = vmul.f32 %v411, 0.2
    %v444 = vmul.f32 %v412, 0.2
    %v445 = vmul.f32 %v413, 0.2
    %v446 = vmul.f32 %v414, 0.2
    %v447 = vmul.f32 %v415, 0.2
    %v448 = vmul.f32 %v416, 0.2
    %v449 = vmul.f32 %v417, 0.2
    %v450 = vsel %vm418, %v402, %v434
    %v451 = vsel %vm419, %v403, %v435
    %v452 = vsel %vm420, %v404, %v436
    %v453 = vsel %vm421, %v405, %v437
    %v454 = vsel %vm422, %v406, %v438
    %v455 = vsel %vm423, %v407, %v439
    %v456 = vsel %vm424, %v408, %v440
    %v457 = vsel %vm425, %v409, %v441
    %v458 = vsel %vm426, %v410, %v442
    %v459 = vsel %vm427, %v411, %v443
    %v460 = vsel %vm428, %v412, %v444
    %v461 = vsel %vm429, %v413, %v445
    %v462 = vsel %vm430, %v414, %v446
    %v463 = vsel %vm431, %v415, %v447
    %v464 = vsel %vm432, %v416, %v448
    %v465 = vsel %vm433, %v417, %v449
    %v466 = vadd.f32 %v450, %v37
    %v467 = vadd.f32 %v451, %v38
    %v468 = vadd.f32 %v452, %v39
    %v469 = vadd.f32 %v453, %v40
    %v470 = vadd.f32 %v454, %v41
    %v471 = vadd.f32 %v455, %v42
    %v472 = vadd.f32 %v456, %v43
    %v473 = vadd.f32 %v457, %v44
    %v474 = vadd.f32 %v458, %v37
    %v475 = vadd.f32 %v459, %v38
    %v476 = vadd.f32 %v460, %v39
    %v477 = vadd.f32 %v461, %v40
    %v478 = vadd.f32 %v462, %v41
    %v479 = vadd.f32 %v463, %v42
    %v480 = vadd.f32 %v464, %v43
    %v481 = vadd.f32 %v465, %v44
    %v482 = vsel %vm100, %v466, -inf
    %483 = vmax.xlane.f32.xlu0 %v482
    %v484 = vpop.xlane.xlu0 %483
    %v485 = vsel %vm100, %v467, -inf
    %486 = vmax.xlane.f32.xlu0 %v485
    %v487 = vpop.xlane.xlu0 %486
    %v488 = vsel %vm100, %v468, -inf
    %489 = vmax.xlane.f32.xlu0 %v488
    %v490 = vpop.xlane.xlu0 %489
    %v491 = vsel %vm100, %v469, -inf
    %492 = vmax.xlane.f32.xlu0 %v491
    %v493 = vpop.xlane.xlu0 %492
    %v494 = vsel %vm100, %v470, -inf
    %495 = vmax.xlane.f32.xlu0 %v494
    %v496 = vpop.xlane.xlu0 %495
    %v497 = vsel %vm100, %v471, -inf
    %498 = vmax.xlane.f32.xlu0 %v497
    %v499 = vpop.xlane.xlu0 %498
    %v500 = vsel %vm100, %v472, -inf
    %501 = vmax.xlane.f32.xlu0 %v500
    %v502 = vpop.xlane.xlu0 %501
    %v503 = vsel %vm100, %v473, -inf
    %504 = vmax.xlane.f32.xlu0 %v503
    %v505 = vpop.xlane.xlu0 %504
    %v506 = vsel %vm100, %v474, -inf
    %507 = vmax.xlane.f32.xlu0 %v506
    %v508 = vpop.xlane.xlu0 %507
    %v509 = vsel %vm100, %v475, -inf
    %510 = vmax.xlane.f32.xlu0 %v509
    %v511 = vpop.xlane.xlu0 %510
    %v512 = vsel %vm100, %v476, -inf
    %513 = vmax.xlane.f32.xlu0 %v512
    %v514 = vpop.xlane.xlu0 %513
    %v515 = vsel %vm100, %v477, -inf
    %516 = vmax.xlane.f32.xlu0 %v515
    %v517 = vpop.xlane.xlu0 %516
    %v518 = vsel %vm100, %v478, -inf
    %519 = vmax.xlane.f32.xlu0 %v518
    %v520 = vpop.xlane.xlu0 %519
    %v521 = vsel %vm100, %v479, -inf
    %522 = vmax.xlane.f32.xlu0 %v521
    %v523 = vpop.xlane.xlu0 %522
    %v524 = vsel %vm100, %v480, -inf
    %525 = vmax.xlane.f32.xlu0 %v524
    %v526 = vpop.xlane.xlu0 %525
    %v527 = vsel %vm100, %v481, -inf
    %528 = vmax.xlane.f32.xlu0 %v527
    %v529 = vpop.xlane.xlu0 %528
    %v530 = vsub.f32 %v466, %v484
    %v531 = vsub.f32 %v467, %v487
    %v532 = vsub.f32 %v468, %v490
    %v533 = vsub.f32 %v469, %v493
    %v534 = vsub.f32 %v470, %v496
    %v535 = vsub.f32 %v471, %v499
    %v536 = vsub.f32 %v472, %v502
    %v537 = vsub.f32 %v473, %v505
    %v538 = vsub.f32 %v474, %v508
    %v539 = vsub.f32 %v475, %v511
    %v540 = vsub.f32 %v476, %v514
    %v541 = vsub.f32 %v477, %v517
    %v542 = vsub.f32 %v478, %v520
    %v543 = vsub.f32 %v479, %v523
    %v544 = vsub.f32 %v480, %v526
    %v545 = vsub.f32 %v481, %v529
    %v546 = vmul.f32 %v530, 1.442695
    %v547 = vpow.pop %v546
    %v548 = vmul.f32 %v531, 1.442695
    %v549 = vpow.pop %v548
    %v550 = vmul.f32 %v532, 1.442695
    %v551 = vpow.pop %v550
    %v552 = vmul.f32 %v533, 1.442695
    %v553 = vpow.pop %v552
    %v554 = vmul.f32 %v534, 1.442695
    %v555 = vpow.pop %v554
    %v556 = vmul.f32 %v535, 1.442695
    %v557 = vpow.pop %v556
    %v558 = vmul.f32 %v536, 1.442695
    %v559 = vpow.pop %v558
    %v560 = vmul.f32 %v537, 1.442695
    %v561 = vpow.pop %v560
    %v562 = vmul.f32 %v538, 1.442695
    %v563 = vpow.pop %v562
    %v564 = vmul.f32 %v539, 1.442695
    %v565 = vpow.pop %v564
    %v566 = vmul.f32 %v540, 1.442695
    %v567 = vpow.pop %v566
    %v568 = vmul.f32 %v541, 1.442695
    %v569 = vpow.pop %v568
    %v570 = vmul.f32 %v542, 1.442695
    %v571 = vpow.pop %v570
    %v572 = vmul.f32 %v543, 1.442695
    %v573 = vpow.pop %v572
    %v574 = vmul.f32 %v544, 1.442695
    %v575 = vpow.pop %v574
    %v576 = vmul.f32 %v545, 1.442695
    %v577 = vpow.pop %v576
    %v578 = vsel %vm100, %v547, 0.0
    %579 = vadd.xlane.f32.xlu0 %v578
    %v580 = vpop.xlane.xlu0 %579
    %v581 = vsel %vm100, %v549, 0.0
    %582 = vadd.xlane.f32.xlu0 %v581
    %v583 = vpop.xlane.xlu0 %582
    %v584 = vsel %vm100, %v551, 0.0
    %585 = vadd.xlane.f32.xlu0 %v584
    %v586 = vpop.xlane.xlu0 %585
    %v587 = vsel %vm100, %v553, 0.0
    %588 = vadd.xlane.f32.xlu0 %v587
    %v589 = vpop.xlane.xlu0 %588
    %v590 = vsel %vm100, %v555, 0.0
    %591 = vadd.xlane.f32.xlu0 %v590
    %v592 = vpop.xlane.xlu0 %591
    %v593 = vsel %vm100, %v557, 0.0
    %594 = vadd.xlane.f32.xlu0 %v593
    %v595 = vpop.xlane.xlu0 %594
    %v596 = vsel %vm100, %v559, 0.0
    %597 = vadd.xlane.f32.xlu0 %v596
    %v598 = vpop.xlane.xlu0 %597
    %v599 = vsel %vm100, %v561, 0.0
    %600 = vadd.xlane.f32.xlu0 %v599
    %v601 = vpop.xlane.xlu0 %600
    %v602 = vsel %vm100, %v563, 0.0
    %603 = vadd.xlane.f32.xlu0 %v602
    %v604 = vpop.xlane.xlu0 %603
    %v605 = vsel %vm100, %v565, 0.0
    %606 = vadd.xlane.f32.xlu0 %v605
    %v607 = vpop.xlane.xlu0 %606
    %v608 = vsel %vm100, %v567, 0.0
    %609 = vadd.xlane.f32.xlu0 %v608
    %v610 = vpop.xlane.xlu0 %609
    %v611 = vsel %vm100, %v569, 0.0
    %612 = vadd.xlane.f32.xlu0 %v611
    %v613 = vpop.xlane.xlu0 %612
    %v614 = vsel %vm100, %v571, 0.0
    %615 = vadd.xlane.f32.xlu0 %v614
    %v616 = vpop.xlane.xlu0 %615
    %v617 = vsel %vm100, %v573, 0.0
    %618 = vadd.xlane.f32.xlu0 %v617
    %v619 = vpop.xlane.xlu0 %618
    %v620 = vsel %vm100, %v575, 0.0
    %621 = vadd.xlane.f32.xlu0 %v620
    %v622 = vpop.xlane.xlu0 %621
    %v623 = vsel %vm100, %v577, 0.0
    %624 = vadd.xlane.f32.xlu0 %v623
    %v625 = vpop.xlane.xlu0 %624
    %v626 = vrcp.pop %v580
    %v627 = vrcp.pop %v583
    %v628 = vrcp.pop %v586
    %v629 = vrcp.pop %v589
    %v630 = vrcp.pop %v592
    %v631 = vrcp.pop %v595
    %v632 = vrcp.pop %v598
    %v633 = vrcp.pop %v601
    %v634 = vrcp.pop %v604
    %v635 = vrcp.pop %v607
    %v636 = vrcp.pop %v610
    %v637 = vrcp.pop %v613
    %v638 = vrcp.pop %v616
    %v639 = vrcp.pop %v619
    %v640 = vrcp.pop %v622
    %v641 = vrcp.pop %v625
    %v643 = vsel %vm100, %v547, 0
    %v646 = vsel %vm100, %v549, 0
    %v649 = vsel %vm100, %v551, 0
    %v652 = vsel %vm100, %v553, 0
    %v655 = vsel %vm100, %v555, 0
    %v658 = vsel %vm100, %v557, 0
    %v661 = vsel %vm100, %v559, 0
    %v664 = vsel %vm100, %v561, 0
    %666 = vmatprep.subr.mxu0 0.0
    %667 = vmatpush1.msra.mxu0 0.0
    %668 = vmatprep.subr.mxu0 0.0
    %669 = vmatpush1.msra.mxu0 0.0
    %670 = vmatprep.subr.mxu0 0.0
    %671 = vmatpush1.msra.mxu0 0.0
    %672 = vmatprep.subr.mxu0 0.0
    %673 = vmatpush1.msra.mxu0 0.0
    %674 = vmatprep.subr.mxu0 0.0
    %675 = vmatpush1.msra.mxu0 0.0
    %676 = vmatprep.subr.mxu0 0.0
    %677 = vmatpush1.msra.mxu0 0.0
    %678 = vmatprep.subr.mxu0 0.0
    %679 = vmatpush1.msra.mxu0 0.0
    %680 = vmatprep.subr.mxu0 0.0
    %681 = vmatpush1.msra.mxu0 0.0
    %682 = vmatprep.subr.mxu0 0.0
    %683 = vmatpush1.msra.mxu0 %v97
    %684 = vmatprep.subr.mxu0 0.0
    %685 = vmatpush1.msra.mxu0 %v96
    %686 = vmatprep.subr.mxu0 0.0
    %687 = vmatpush1.msra.mxu0 %v95
    %688 = vmatprep.subr.mxu0 0.0
    %689 = vmatpush1.msra.mxu0 %v94
    %690 = vmatprep.subr.mxu0 0.0
    %691 = vmatpush1.msra.mxu0 %v93
    %692 = vmatprep.subr.mxu0 0.0
    %693 = vmatpush1.msra.mxu0 %v92
    %694 = vmatprep.subr.mxu0 0.0
    %695 = vmatpush1.msra.mxu0 %v91
    %696 = vmatprep.subr.mxu0 0.0
    %697 = vmatpush1.msra.mxu0 %v90
    %698 = vmatprep.subr.mxu0 0.0
    %699 = vmatpush2.msra.mxu0 0.0
    %700 = vmatprep.subr.mxu0 0.0
    %701 = vmatpush2.msra.mxu0 0.0
    %702 = vmatprep.subr.mxu0 0.0
    %703 = vmatpush2.msra.mxu0 0.0
    %704 = vmatprep.subr.mxu0 0.0
    %705 = vmatpush2.msra.mxu0 0.0
    %706 = vmatprep.subr.mxu0 0.0
    %707 = vmatpush2.msra.mxu0 0.0
    %708 = vmatprep.subr.mxu0 0.0
    %709 = vmatpush2.msra.mxu0 0.0
    %710 = vmatprep.subr.mxu0 0.0
    %711 = vmatpush2.msra.mxu0 0.0
    %712 = vmatprep.subr.mxu0 0.0
    %713 = vmatpush2.msra.mxu0 0.0
    %714 = vmatprep.subr.mxu0 0.0
    %715 = vmatpush2.msra.mxu0 0.0
    %716 = vmatprep.subr.mxu0 0.0
    %717 = vmatpush2.msra.mxu0 0.0
    %718 = vmatprep.subr.mxu0 0.0
    %719 = vmatpush2.msra.mxu0 0.0
    %720 = vmatprep.subr.mxu0 0.0
    %721 = vmatpush2.msra.mxu0 0.0
    %722 = vmatprep.subr.mxu0 0.0
    %723 = vmatpush2.msra.mxu0 0.0
    %724 = vmatprep.subr.mxu0 0.0
    %725 = vmatpush2.msra.mxu0 0.0
    %726 = vmatprep.subr.mxu0 0.0
    %727 = vmatpush2.msra.mxu0 0.0
    %728 = vmatprep.subr.mxu0 0.0
    %729 = vmatpush2.msra.mxu0 0.0
    %730 = vmatprep.mubr.f32.mxu0 0.0
    %731 = vmatmul.mubr.f32.gmra.mxu0 %v643
    %v732 = vpop.f32.mrf.mxu0
    %v733 = vadd.f32 0.0, %v732
    %v734 = vpop.f32.mrf.mxu0
    %735 = vmatprep.mubr.f32.mxu0 0.0
    %736 = vmatmul.mubr.f32.gmra.mxu0 %v646
    %v737 = vpop.f32.mrf.mxu0
    %v738 = vadd.f32 0.0, %v737
    %v739 = vpop.f32.mrf.mxu0
    %740 = vmatprep.mubr.f32.mxu0 0.0
    %741 = vmatmul.mubr.f32.gmra.mxu0 %v649
    %v742 = vpop.f32.mrf.mxu0
    %v743 = vadd.f32 0.0, %v742
    %v744 = vpop.f32.mrf.mxu0
    %745 = vmatprep.mubr.f32.mxu0 0.0
    %746 = vmatmul.mubr.f32.gmra.mxu0 %v652
    %v747 = vpop.f32.mrf.mxu0
    %v748 = vadd.f32 0.0, %v747
    %v749 = vpop.f32.mrf.mxu0
    %750 = vmatprep.mubr.f32.mxu0 0.0
    %751 = vmatmul.mubr.f32.gmra.mxu0 %v655
    %v752 = vpop.f32.mrf.mxu0
    %v753 = vadd.f32 0.0, %v752
    %v754 = vpop.f32.mrf.mxu0
    %755 = vmatprep.mubr.f32.mxu0 0.0
    %756 = vmatmul.mubr.f32.gmra.mxu0 %v658
    %v757 = vpop.f32.mrf.mxu0
    %v758 = vadd.f32 0.0, %v757
    %v759 = vpop.f32.mrf.mxu0
    %760 = vmatprep.mubr.f32.mxu0 0.0
    %761 = vmatmul.mubr.f32.gmra.mxu0 %v661
    %v762 = vpop.f32.mrf.mxu0
    %v763 = vadd.f32 0.0, %v762
    %v764 = vpop.f32.mrf.mxu0
    %765 = vmatprep.mubr.f32.mxu0 0.0
    %766 = vmatmul.mubr.f32.gmra.mxu0 %v664
    %v767 = vpop.f32.mrf.mxu0
    %v768 = vadd.f32 0.0, %v767
    %v769 = vpop.f32.mrf.mxu0
    %770 = vdwg.mxu0
    %v771 = vmul.f32 %v733, %v626
    %v772 = vmul.f32 %v738, %v627
    %v773 = vmul.f32 %v743, %v628
    %v774 = vmul.f32 %v748, %v629
    %v775 = vmul.f32 %v753, %v630
    %v776 = vmul.f32 %v758, %v631
    %v777 = vmul.f32 %v763, %v632
    %v778 = vmul.f32 %v768, %v633
    %779 = vrot.lane.b32.xlu0 %v90, 96
    %v780 = vpop.permute.xlu0 %779
    %781 = vrot.lane.b32.xlu0 %v91, 96
    %v782 = vpop.permute.xlu0 %781
    %783 = vrot.lane.b32.xlu0 %v92, 96
    %v784 = vpop.permute.xlu0 %783
    %785 = vrot.lane.b32.xlu0 %v93, 96
    %v786 = vpop.permute.xlu0 %785
    %787 = vrot.lane.b32.xlu0 %v94, 96
    %v788 = vpop.permute.xlu0 %787
    %789 = vrot.lane.b32.xlu0 %v95, 96
    %v790 = vpop.permute.xlu0 %789
    %791 = vrot.lane.b32.xlu0 %v96, 96
    %v792 = vpop.permute.xlu0 %791
    %793 = vrot.lane.b32.xlu0 %v97, 96
    %v794 = vpop.permute.xlu0 %793
    %v804 = vsel %vm100, %v563, 0
    %v807 = vsel %vm100, %v565, 0
    %v810 = vsel %vm100, %v567, 0
    %v813 = vsel %vm100, %v569, 0
    %v816 = vsel %vm100, %v571, 0
    %v819 = vsel %vm100, %v573, 0
    %v822 = vsel %vm100, %v575, 0
    %v825 = vsel %vm100, %v577, 0
    %827 = vmatprep.subr.mxu0 0.0
    %828 = vmatpush1.msra.mxu0 0.0
    %829 = vmatprep.subr.mxu0 0.0
    %830 = vmatpush1.msra.mxu0 0.0
    %831 = vmatprep.subr.mxu0 0.0
    %832 = vmatpush1.msra.mxu0 0.0
    %833 = vmatprep.subr.mxu0 0.0
    %834 = vmatpush1.msra.mxu0 0.0
    %835 = vmatprep.subr.mxu0 0.0
    %836 = vmatpush1.msra.mxu0 0.0
    %837 = vmatprep.subr.mxu0 0.0
    %838 = vmatpush1.msra.mxu0 0.0
    %839 = vmatprep.subr.mxu0 0.0
    %840 = vmatpush1.msra.mxu0 0.0
    %841 = vmatprep.subr.mxu0 0.0
    %842 = vmatpush1.msra.mxu0 0.0
    %843 = vmatprep.subr.mxu0 0.0
    %844 = vmatpush1.msra.mxu0 %v794
    %845 = vmatprep.subr.mxu0 0.0
    %846 = vmatpush1.msra.mxu0 %v792
    %847 = vmatprep.subr.mxu0 0.0
    %848 = vmatpush1.msra.mxu0 %v790
    %849 = vmatprep.subr.mxu0 0.0
    %850 = vmatpush1.msra.mxu0 %v788
    %851 = vmatprep.subr.mxu0 0.0
    %852 = vmatpush1.msra.mxu0 %v786
    %853 = vmatprep.subr.mxu0 0.0
    %854 = vmatpush1.msra.mxu0 %v784
    %855 = vmatprep.subr.mxu0 0.0
    %856 = vmatpush1.msra.mxu0 %v782
    %857 = vmatprep.subr.mxu0 0.0
    %858 = vmatpush1.msra.mxu0 %v780
    %859 = vmatprep.subr.mxu0 0.0
    %860 = vmatpush2.msra.mxu0 0.0
    %861 = vmatprep.subr.mxu0 0.0
    %862 = vmatpush2.msra.mxu0 0.0
    %863 = vmatprep.subr.mxu0 0.0
    %864 = vmatpush2.msra.mxu0 0.0
    %865 = vmatprep.subr.mxu0 0.0
    %866 = vmatpush2.msra.mxu0 0.0
    %867 = vmatprep.subr.mxu0 0.0
    %868 = vmatpush2.msra.mxu0 0.0
    %869 = vmatprep.subr.mxu0 0.0
    %870 = vmatpush2.msra.mxu0 0.0
    %871 = vmatprep.subr.mxu0 0.0
    %872 = vmatpush2.msra.mxu0 0.0
    %873 = vmatprep.subr.mxu0 0.0
    %874 = vmatpush2.msra.mxu0 0.0
    %875 = vmatprep.subr.mxu0 0.0
    %876 = vmatpush2.msra.mxu0 0.0
    %877 = vmatprep.subr.mxu0 0.0
    %878 = vmatpush2.msra.mxu0 0.0
    %879 = vmatprep.subr.mxu0 0.0
    %880 = vmatpush2.msra.mxu0 0.0
    %881 = vmatprep.subr.mxu0 0.0
    %882 = vmatpush2.msra.mxu0 0.0
    %883 = vmatprep.subr.mxu0 0.0
    %884 = vmatpush2.msra.mxu0 0.0
    %885 = vmatprep.subr.mxu0 0.0
    %886 = vmatpush2.msra.mxu0 0.0
    %887 = vmatprep.subr.mxu0 0.0
    %888 = vmatpush2.msra.mxu0 0.0
    %889 = vmatprep.subr.mxu0 0.0
    %890 = vmatpush2.msra.mxu0 0.0
    %891 = vmatprep.mubr.f32.mxu0 0.0
    %892 = vmatmul.mubr.f32.gmra.mxu0 %v804
    %v893 = vpop.f32.mrf.mxu0
    %v894 = vadd.f32 0.0, %v893
    %v895 = vpop.f32.mrf.mxu0
    %896 = vmatprep.mubr.f32.mxu0 0.0
    %897 = vmatmul.mubr.f32.gmra.mxu0 %v807
    %v898 = vpop.f32.mrf.mxu0
    %v899 = vadd.f32 0.0, %v898
    %v900 = vpop.f32.mrf.mxu0
    %901 = vmatprep.mubr.f32.mxu0 0.0
    %902 = vmatmul.mubr.f32.gmra.mxu0 %v810
    %v903 = vpop.f32.mrf.mxu0
    %v904 = vadd.f32 0.0, %v903
    %v905 = vpop.f32.mrf.mxu0
    %906 = vmatprep.mubr.f32.mxu0 0.0
    %907 = vmatmul.mubr.f32.gmra.mxu0 %v813
    %v908 = vpop.f32.mrf.mxu0
    %v909 = vadd.f32 0.0, %v908
    %v910 = vpop.f32.mrf.mxu0
    %911 = vmatprep.mubr.f32.mxu0 0.0
    %912 = vmatmul.mubr.f32.gmra.mxu0 %v816
    %v913 = vpop.f32.mrf.mxu0
    %v914 = vadd.f32 0.0, %v913
    %v915 = vpop.f32.mrf.mxu0
    %916 = vmatprep.mubr.f32.mxu0 0.0
    %917 = vmatmul.mubr.f32.gmra.mxu0 %v819
    %v918 = vpop.f32.mrf.mxu0
    %v919 = vadd.f32 0.0, %v918
    %v920 = vpop.f32.mrf.mxu0
    %921 = vmatprep.mubr.f32.mxu0 0.0
    %922 = vmatmul.mubr.f32.gmra.mxu0 %v822
    %v923 = vpop.f32.mrf.mxu0
    %v924 = vadd.f32 0.0, %v923
    %v925 = vpop.f32.mrf.mxu0
    %926 = vmatprep.mubr.f32.mxu0 0.0
    %927 = vmatmul.mubr.f32.gmra.mxu0 %v825
    %v928 = vpop.f32.mrf.mxu0
    %v929 = vadd.f32 0.0, %v928
    %v930 = vpop.f32.mrf.mxu0
    %931 = vdwg.mxu0
    %v932 = vmul.f32 %v894, %v634
    %v933 = vmul.f32 %v899, %v635
    %v934 = vmul.f32 %v904, %v636
    %v935 = vmul.f32 %v909, %v637
    %v936 = vmul.f32 %v914, %v638
    %v937 = vmul.f32 %v919, %v639
    %v938 = vmul.f32 %v924, %v640
    %v939 = vmul.f32 %v929, %v641
    %948 = vrot.lane.b32.xlu0 %v932, 32
    %v949 = vpop.permute.xlu0 %948
    %950 = vrot.lane.b32.xlu0 %v933, 32
    %v951 = vpop.permute.xlu0 %950
    %952 = vrot.lane.b32.xlu0 %v934, 32
    %v953 = vpop.permute.xlu0 %952
    %954 = vrot.lane.b32.xlu0 %v935, 32
    %v955 = vpop.permute.xlu0 %954
    %956 = vrot.lane.b32.xlu0 %v936, 32
    %v957 = vpop.permute.xlu0 %956
    %958 = vrot.lane.b32.xlu0 %v937, 32
    %v959 = vpop.permute.xlu0 %958
    %960 = vrot.lane.b32.xlu0 %v938, 32
    %v961 = vpop.permute.xlu0 %960
    %962 = vrot.lane.b32.xlu0 %v939, 32
    %v963 = vpop.permute.xlu0 %962
    %vm972 = vcmask 261120
    %v973 = vsel %vm972, %v771, %v949
    %v974 = vsel %vm972, %v772, %v951
    %v975 = vsel %vm972, %v773, %v953
    %v976 = vsel %vm972, %v774, %v955
    %v977 = vsel %vm972, %v775, %v957
    %v978 = vsel %vm972, %v776, %v959
    %v979 = vsel %vm972, %v777, %v961
    %v980 = vsel %vm972, %v778, %v963
    %v981 = vld [vmem:[#allocation2 + $0x18] sm:$0x1]
    %v982 = vlaneseq
    %v983 = vshrl.u32 %v982, 7
    %v984 = vsub.s32 0, %v983
    %v985 = vrot.slane %v981, %v984
    %v986 = vadd.f32 %v973, %v985
    %v987 = vadd.f32 %v974, %v985
    %v988 = vadd.f32 %v975, %v985
    %v989 = vadd.f32 %v976, %v985
    %v990 = vadd.f32 %v977, %v985
    %v991 = vadd.f32 %v978, %v985
    %v992 = vadd.f32 %v979, %v985
    %v993 = vadd.f32 %v980, %v985
    %vm994 = vcmp.gt.f32.partialorder %v986, 0.0
    %vm995 = vcmp.gt.f32.partialorder %v987, 0.0
    %vm996 = vcmp.gt.f32.partialorder %v988, 0.0
    %vm997 = vcmp.gt.f32.partialorder %v989, 0.0
    %vm998 = vcmp.gt.f32.partialorder %v990, 0.0
    %vm999 = vcmp.gt.f32.partialorder %v991, 0.0
    %vm1000 = vcmp.gt.f32.partialorder %v992, 0.0
    %vm1001 = vcmp.gt.f32.partialorder %v993, 0.0
    %v1002 = vmin.f32 %v986, 0.0
    %v1003 = vmin.f32 %v987, 0.0
    %v1004 = vmin.f32 %v988, 0.0
    %v1005 = vmin.f32 %v989, 0.0
    %v1006 = vmin.f32 %v990, 0.0
    %v1007 = vmin.f32 %v991, 0.0
    %v1008 = vmin.f32 %v992, 0.0
    %v1009 = vmin.f32 %v993, 0.0
    %v1010 = vmul.f32 %v1002, 1.442695
    %v1011 = vpow.pop %v1010
    %v1012 = vmul.f32 %v1003, 1.442695
    %v1013 = vpow.pop %v1012
    %v1014 = vmul.f32 %v1004, 1.442695
    %v1015 = vpow.pop %v1014
    %v1016 = vmul.f32 %v1005, 1.442695
    %v1017 = vpow.pop %v1016
    %v1018 = vmul.f32 %v1006, 1.442695
    %v1019 = vpow.pop %v1018
    %v1020 = vmul.f32 %v1007, 1.442695
    %v1021 = vpow.pop %v1020
    %v1022 = vmul.f32 %v1008, 1.442695
    %v1023 = vpow.pop %v1022
    %v1024 = vmul.f32 %v1009, 1.442695
    %v1025 = vpow.pop %v1024
    %v1026 = vsub.f32 %v1011, 1.0
    %v1027 = vsub.f32 %v1013, 1.0
    %v1028 = vsub.f32 %v1015, 1.0
    %v1029 = vsub.f32 %v1017, 1.0
    %v1030 = vsub.f32 %v1019, 1.0
    %v1031 = vsub.f32 %v1021, 1.0
    %v1032 = vsub.f32 %v1023, 1.0
    %v1033 = vsub.f32 %v1025, 1.0
    %v1034 = vsel %vm994, %v986, %v1026
    %v1035 = vsel %vm995, %v987, %v1027
    %v1036 = vsel %vm996, %v988, %v1028
    %v1037 = vsel %vm997, %v989, %v1029
    %v1038 = vsel %vm998, %v990, %v1030
    %v1039 = vsel %vm999, %v991, %v1031
    %v1040 = vsel %vm1000, %v992, %v1032
    %v1041 = vsel %vm1001, %v993, %v1033
    %v1042 = vld [vmem:[#allocation2 + $0x20] sm:$0xff]
    %v1043 = vld [vmem:[#allocation2 + $0x28] sm:$0xff]
    %v1044 = vld [vmem:[#allocation2 + $0x30] sm:$0xff]
    %v1045 = vld [vmem:[#allocation2 + $0x38] sm:$0xff]
    %v1046 = vld [vmem:[#allocation2 + $0x40] sm:$0xff]
    %v1047 = vld [vmem:[#allocation2 + $0x48] sm:$0xff]
    %v1048 = vld [vmem:[#allocation2 + $0x50] sm:$0xff]
    %v1049 = vld [vmem:[#allocation2 + $0x58] sm:$0xff]
    %v1051 = vsel %vm100, %v1034, 0
    %v1054 = vsel %vm100, %v1035, 0
    %v1057 = vsel %vm100, %v1036, 0
    %v1060 = vsel %vm100, %v1037, 0
    %v1063 = vsel %vm100, %v1038, 0
    %v1066 = vsel %vm100, %v1039, 0
    %v1069 = vsel %vm100, %v1040, 0
    %v1072 = vsel %vm100, %v1041, 0
    %1074 = vmatprep.subr.mxu0 0.0
    %1075 = vmatpush1.msra.mxu0 0.0
    %1076 = vmatprep.subr.mxu0 0.0
    %1077 = vmatpush1.msra.mxu0 0.0
    %1078 = vmatprep.subr.mxu0 0.0
    %1079 = vmatpush1.msra.mxu0 0.0
    %1080 = vmatprep.subr.mxu0 0.0
    %1081 = vmatpush1.msra.mxu0 0.0
    %1082 = vmatprep.subr.mxu0 0.0
    %1083 = vmatpush1.msra.mxu0 0.0
    %1084 = vmatprep.subr.mxu0 0.0
    %1085 = vmatpush1.msra.mxu0 0.0
    %1086 = vmatprep.subr.mxu0 0.0
    %1087 = vmatpush1.msra.mxu0 0.0
    %1088 = vmatprep.subr.mxu0 0.0
    %1089 = vmatpush1.msra.mxu0 0.0
    %1090 = vmatprep.subr.mxu0 0.0
    %1091 = vmatpush1.msra.mxu0 %v1049
    %1092 = vmatprep.subr.mxu0 0.0
    %1093 = vmatpush1.msra.mxu0 %v1048
    %1094 = vmatprep.subr.mxu0 0.0
    %1095 = vmatpush1.msra.mxu0 %v1047
    %1096 = vmatprep.subr.mxu0 0.0
    %1097 = vmatpush1.msra.mxu0 %v1046
    %1098 = vmatprep.subr.mxu0 0.0
    %1099 = vmatpush1.msra.mxu0 %v1045
    %1100 = vmatprep.subr.mxu0 0.0
    %1101 = vmatpush1.msra.mxu0 %v1044
    %1102 = vmatprep.subr.mxu0 0.0
    %1103 = vmatpush1.msra.mxu0 %v1043
    %1104 = vmatprep.subr.mxu0 0.0
    %1105 = vmatpush1.msra.mxu0 %v1042
    %1106 = vmatprep.subr.mxu0 0.0
    %1107 = vmatpush2.msra.mxu0 0.0
    %1108 = vmatprep.subr.mxu0 0.0
    %1109 = vmatpush2.msra.mxu0 0.0
    %1110 = vmatprep.subr.mxu0 0.0
    %1111 = vmatpush2.msra.mxu0 0.0
    %1112 = vmatprep.subr.mxu0 0.0
    %1113 = vmatpush2.msra.mxu0 0.0
    %1114 = vmatprep.subr.mxu0 0.0
    %1115 = vmatpush2.msra.mxu0 0.0
    %1116 = vmatprep.subr.mxu0 0.0
    %1117 = vmatpush2.msra.mxu0 0.0
    %1118 = vmatprep.subr.mxu0 0.0
    %1119 = vmatpush2.msra.mxu0 0.0
    %1120 = vmatprep.subr.mxu0 0.0
    %1121 = vmatpush2.msra.mxu0 0.0
    %1122 = vmatprep.subr.mxu0 0.0
    %1123 = vmatpush2.msra.mxu0 0.0
    %1124 = vmatprep.subr.mxu0 0.0
    %1125 = vmatpush2.msra.mxu0 0.0
    %1126 = vmatprep.subr.mxu0 0.0
    %1127 = vmatpush2.msra.mxu0 0.0
    %1128 = vmatprep.subr.mxu0 0.0
    %1129 = vmatpush2.msra.mxu0 0.0
    %1130 = vmatprep.subr.mxu0 0.0
    %1131 = vmatpush2.msra.mxu0 0.0
    %1132 = vmatprep.subr.mxu0 0.0
    %1133 = vmatpush2.msra.mxu0 0.0
    %1134 = vmatprep.subr.mxu0 0.0
    %1135 = vmatpush2.msra.mxu0 0.0
    %1136 = vmatprep.subr.mxu0 0.0
    %1137 = vmatpush2.msra.mxu0 0.0
    %1138 = vmatprep.mubr.f32.mxu0 0.0
    %1139 = vmatmul.mubr.f32.gmra.mxu0 %v1051
    %v1140 = vpop.f32.mrf.mxu0
    %v1141 = vadd.f32 0.0, %v1140
    %v1142 = vpop.f32.mrf.mxu0
    %1143 = vmatprep.mubr.f32.mxu0 0.0
    %1144 = vmatmul.mubr.f32.gmra.mxu0 %v1054
    %v1145 = vpop.f32.mrf.mxu0
    %v1146 = vadd.f32 0.0, %v1145
    %v1147 = vpop.f32.mrf.mxu0
    %1148 = vmatprep.mubr.f32.mxu0 0.0
    %1149 = vmatmul.mubr.f32.gmra.mxu0 %v1057
    %v1150 = vpop.f32.mrf.mxu0
    %v1151 = vadd.f32 0.0, %v1150
    %v1152 = vpop.f32.mrf.mxu0
    %1153 = vmatprep.mubr.f32.mxu0 0.0
    %1154 = vmatmul.mubr.f32.gmra.mxu0 %v1060
    %v1155 = vpop.f32.mrf.mxu0
    %v1156 = vadd.f32 0.0, %v1155
    %v1157 = vpop.f32.mrf.mxu0
    %1158 = vmatprep.mubr.f32.mxu0 0.0
    %1159 = vmatmul.mubr.f32.gmra.mxu0 %v1063
    %v1160 = vpop.f32.mrf.mxu0
    %v1161 = vadd.f32 0.0, %v1160
    %v1162 = vpop.f32.mrf.mxu0
    %1163 = vmatprep.mubr.f32.mxu0 0.0
    %1164 = vmatmul.mubr.f32.gmra.mxu0 %v1066
    %v1165 = vpop.f32.mrf.mxu0
    %v1166 = vadd.f32 0.0, %v1165
    %v1167 = vpop.f32.mrf.mxu0
    %1168 = vmatprep.mubr.f32.mxu0 0.0
    %1169 = vmatmul.mubr.f32.gmra.mxu0 %v1069
    %v1170 = vpop.f32.mrf.mxu0
    %v1171 = vadd.f32 0.0, %v1170
    %v1172 = vpop.f32.mrf.mxu0
    %1173 = vmatprep.mubr.f32.mxu0 0.0
    %1174 = vmatmul.mubr.f32.gmra.mxu0 %v1072
    %v1175 = vpop.f32.mrf.mxu0
    %v1176 = vadd.f32 0.0, %v1175
    %v1177 = vpop.f32.mrf.mxu0
    %1178 = vdwg.mxu0
    %v1179 = vld [vmem:[#allocation2 + $0x60] sm:$0x1]
    %v1180 = vld [vmem:[#allocation2 + $0x68] sm:$0x1]
    %v1182 = vsel %vm972, %v1179, 0
    %v1185 = vsel %vm972, %v1141, 0
    %v1188 = vsel %vm972, %v1146, 0
    %v1191 = vsel %vm972, %v1151, 0
    %v1194 = vsel %vm972, %v1156, 0
    %v1197 = vsel %vm972, %v1161, 0
    %v1200 = vsel %vm972, %v1166, 0
    %v1203 = vsel %vm972, %v1171, 0
    %v1206 = vsel %vm972, %v1176, 0
    %1208 = vmatprep.subr.mxu0 0.0
    %1209 = vmatpush1.xpose.msra.mxu0 0.0
    %1210 = vmatprep.subr.mxu0 0.0
    %1211 = vmatpush1.xpose.msra.mxu0 0.0
    %1212 = vmatprep.subr.mxu0 0.0
    %1213 = vmatpush1.xpose.msra.mxu0 0.0
    %1214 = vmatprep.subr.mxu0 0.0
    %1215 = vmatpush1.xpose.msra.mxu0 0.0
    %1216 = vmatprep.subr.mxu0 0.0
    %1217 = vmatpush1.xpose.msra.mxu0 0.0
    %1218 = vmatprep.subr.mxu0 0.0
    %1219 = vmatpush1.xpose.msra.mxu0 0.0
    %1220 = vmatprep.subr.mxu0 0.0
    %1221 = vmatpush1.xpose.msra.mxu0 0.0
    %1222 = vmatprep.subr.mxu0 0.0
    %1223 = vmatpush1.xpose.msra.mxu0 0.0
    %1224 = vmatprep.subr.mxu0 0.0
    %1225 = vmatpush1.xpose.msra.mxu0 %v1206
    %1226 = vmatprep.subr.mxu0 0.0
    %1227 = vmatpush1.xpose.msra.mxu0 %v1203
    %1228 = vmatprep.subr.mxu0 0.0
    %1229 = vmatpush1.xpose.msra.mxu0 %v1200
    %1230 = vmatprep.subr.mxu0 0.0
    %1231 = vmatpush1.xpose.msra.mxu0 %v1197
    %1232 = vmatprep.subr.mxu0 0.0
    %1233 = vmatpush1.xpose.msra.mxu0 %v1194
    %1234 = vmatprep.subr.mxu0 0.0
    %1235 = vmatpush1.xpose.msra.mxu0 %v1191
    %1236 = vmatprep.subr.mxu0 0.0
    %1237 = vmatpush1.xpose.msra.mxu0 %v1188
    %1238 = vmatprep.subr.mxu0 0.0
    %1239 = vmatpush1.xpose.msra.mxu0 %v1185
    %1240 = vmatprep.subr.mxu0 0.0
    %1241 = vmatpush2.xpose.msra.mxu0 0.0
    %1242 = vmatprep.subr.mxu0 0.0
    %1243 = vmatpush2.xpose.msra.mxu0 0.0
    %1244 = vmatprep.subr.mxu0 0.0
    %1245 = vmatpush2.xpose.msra.mxu0 0.0
    %1246 = vmatprep.subr.mxu0 0.0
    %1247 = vmatpush2.xpose.msra.mxu0 0.0
    %1248 = vmatprep.subr.mxu0 0.0
    %1249 = vmatpush2.xpose.msra.mxu0 0.0
    %1250 = vmatprep.subr.mxu0 0.0
    %1251 = vmatpush2.xpose.msra.mxu0 0.0
    %1252 = vmatprep.subr.mxu0 0.0
    %1253 = vmatpush2.xpose.msra.mxu0 0.0
    %1254 = vmatprep.subr.mxu0 0.0
    %1255 = vmatpush2.xpose.msra.mxu0 0.0
    %1256 = vmatprep.subr.mxu0 0.0
    %1257 = vmatpush2.xpose.msra.mxu0 0.0
    %1258 = vmatprep.subr.mxu0 0.0
    %1259 = vmatpush2.xpose.msra.mxu0 0.0
    %1260 = vmatprep.subr.mxu0 0.0
    %1261 = vmatpush2.xpose.msra.mxu0 0.0
    %1262 = vmatprep.subr.mxu0 0.0
    %1263 = vmatpush2.xpose.msra.mxu0 0.0
    %1264 = vmatprep.subr.mxu0 0.0
    %1265 = vmatpush2.xpose.msra.mxu0 0.0
    %1266 = vmatprep.subr.mxu0 0.0
    %1267 = vmatpush2.xpose.msra.mxu0 0.0
    %1268 = vmatprep.subr.mxu0 0.0
    %1269 = vmatpush2.xpose.msra.mxu0 0.0
    %1270 = vmatprep.subr.mxu0 0.0
    %1271 = vmatpush2.xpose.msra.mxu0 0.0
    %1272 = vmatprep.mubr.f32.mxu0 0.0
    %1273 = vmatmul.mubr.f32.gmra.mxu0 %v1182
    %v1274 = vpop.f32.mrf.mxu0
    %v1275 = vadd.f32 0.0, %v1274
    %v1276 = vpop.f32.mrf.mxu0
    %1277 = vdwg.mxu0
    %v1278 = vlaneseq
    %v1279 = vshrl.u32 %v1278, 7
    %v1280 = vsub.s32 0, %v1279
    %v1281 = vrot.slane %v1180, %v1280
    %v1282 = vmul.f32 %v1141, %v1281
    %v1283 = vmul.f32 %v1146, %v1281
    %v1284 = vmul.f32 %v1151, %v1281
    %v1285 = vmul.f32 %v1156, %v1281
    %v1286 = vmul.f32 %v1161, %v1281
    %v1287 = vmul.f32 %v1166, %v1281
    %v1288 = vmul.f32 %v1171, %v1281
    %v1289 = vmul.f32 %v1176, %v1281
    %v1290 = vsel %vm972, %v1282, 0.0
    %1291 = vadd.xlane.f32.xlu0 %v1290
    %v1292 = vpop.xlane.xlu0 %1291
    %v1293 = vsel %vm972, %v1283, 0.0
    %1294 = vadd.xlane.f32.xlu0 %v1293
    %v1295 = vpop.xlane.xlu0 %1294
    %v1296 = vsel %vm972, %v1284, 0.0
    %1297 = vadd.xlane.f32.xlu0 %v1296
    %v1298 = vpop.xlane.xlu0 %1297
    %v1299 = vsel %vm972, %v1285, 0.0
    %1300 = vadd.xlane.f32.xlu0 %v1299
    %v1301 = vpop.xlane.xlu0 %1300
    %v1302 = vsel %vm972, %v1286, 0.0
    %1303 = vadd.xlane.f32.xlu0 %v1302
    %v1304 = vpop.xlane.xlu0 %1303
    %v1305 = vsel %vm972, %v1287, 0.0
    %1306 = vadd.xlane.f32.xlu0 %v1305
    %v1307 = vpop.xlane.xlu0 %1306
    %v1308 = vsel %vm972, %v1288, 0.0
    %1309 = vadd.xlane.f32.xlu0 %v1308
    %v1310 = vpop.xlane.xlu0 %1309
    %v1311 = vsel %vm972, %v1289, 0.0
    %1312 = vadd.xlane.f32.xlu0 %v1311
    %v1313 = vpop.xlane.xlu0 %1312
    %v1314 = vlaneseq
    %v1315 = vshrl.u32 %v1314, 7
    %v1316 = vsub.s32 0, %v1315
    %v1317 = vrot.slane %v1275, %v1316
    %v1318 = vadd.f32 %v1292, %v1317
    %v1319 = vadd.f32 %v1295, %v1317
    %v1320 = vadd.f32 %v1298, %v1317
    %v1321 = vadd.f32 %v1301, %v1317
    %v1322 = vadd.f32 %v1304, %v1317
    %v1323 = vadd.f32 %v1307, %v1317
    %v1324 = vadd.f32 %v1310, %v1317
    %v1325 = vadd.f32 %v1313, %v1317
    %vm1326 = vcmp.gt.f32.partialorder %v1318, 0.0
    %vm1327 = vcmp.gt.f32.partialorder %v1319, 0.0
    %vm1328 = vcmp.gt.f32.partialorder %v1320, 0.0
    %vm1329 = vcmp.gt.f32.partialorder %v1321, 0.0
    %vm1330 = vcmp.gt.f32.partialorder %v1322, 0.0
    %vm1331 = vcmp.gt.f32.partialorder %v1323, 0.0
    %vm1332 = vcmp.gt.f32.partialorder %v1324, 0.0
    %vm1333 = vcmp.gt.f32.partialorder %v1325, 0.0
    %v1334 = vmul.f32 %v1318, 0.2
    %v1335 = vmul.f32 %v1319, 0.2
    %v1336 = vmul.f32 %v1320, 0.2
    %v1337 = vmul.f32 %v1321, 0.2
    %v1338 = vmul.f32 %v1322, 0.2
    %v1339 = vmul.f32 %v1323, 0.2
    %v1340 = vmul.f32 %v1324, 0.2
    %v1341 = vmul.f32 %v1325, 0.2
    %v1342 = vsel %vm1326, %v1318, %v1334
    %v1343 = vsel %vm1327, %v1319, %v1335
    %v1344 = vsel %vm1328, %v1320, %v1336
    %v1345 = vsel %vm1329, %v1321, %v1337
    %v1346 = vsel %vm1330, %v1322, %v1338
    %v1347 = vsel %vm1331, %v1323, %v1339
    %v1348 = vsel %vm1332, %v1324, %v1340
    %v1349 = vsel %vm1333, %v1325, %v1341
    %v1350 = vadd.f32 %v1342, %v37
    %v1351 = vadd.f32 %v1343, %v38
    %v1352 = vadd.f32 %v1344, %v39
    %v1353 = vadd.f32 %v1345, %v40
    %v1354 = vadd.f32 %v1346, %v41
    %v1355 = vadd.f32 %v1347, %v42
    %v1356 = vadd.f32 %v1348, %v43
    %v1357 = vadd.f32 %v1349, %v44
    %v1358 = vsel %vm100, %v1350, -inf
    %1359 = vmax.xlane.f32.xlu0 %v1358
    %v1360 = vpop.xlane.xlu0 %1359
    %v1361 = vsel %vm100, %v1351, -inf
    %1362 = vmax.xlane.f32.xlu0 %v1361
    %v1363 = vpop.xlane.xlu0 %1362
    %v1364 = vsel %vm100, %v1352, -inf
    %1365 = vmax.xlane.f32.xlu0 %v1364
    %v1366 = vpop.xlane.xlu0 %1365
    %v1367 = vsel %vm100, %v1353, -inf
    %1368 = vmax.xlane.f32.xlu0 %v1367
    %v1369 = vpop.xlane.xlu0 %1368
    %v1370 = vsel %vm100, %v1354, -inf
    %1371 = vmax.xlane.f32.xlu0 %v1370
    %v1372 = vpop.xlane.xlu0 %1371
    %v1373 = vsel %vm100, %v1355, -inf
    %1374 = vmax.xlane.f32.xlu0 %v1373
    %v1375 = vpop.xlane.xlu0 %1374
    %v1376 = vsel %vm100, %v1356, -inf
    %1377 = vmax.xlane.f32.xlu0 %v1376
    %v1378 = vpop.xlane.xlu0 %1377
    %v1379 = vsel %vm100, %v1357, -inf
    %1380 = vmax.xlane.f32.xlu0 %v1379
    %v1381 = vpop.xlane.xlu0 %1380
    %v1382 = vsub.f32 %v1350, %v1360
    %v1383 = vsub.f32 %v1351, %v1363
    %v1384 = vsub.f32 %v1352, %v1366
    %v1385 = vsub.f32 %v1353, %v1369
    %v1386 = vsub.f32 %v1354, %v1372
    %v1387 = vsub.f32 %v1355, %v1375
    %v1388 = vsub.f32 %v1356, %v1378
    %v1389 = vsub.f32 %v1357, %v1381
    %v1390 = vmul.f32 %v1382, 1.442695
    %v1391 = vpow.pop %v1390
    %v1392 = vmul.f32 %v1383, 1.442695
    %v1393 = vpow.pop %v1392
    %v1394 = vmul.f32 %v1384, 1.442695
    %v1395 = vpow.pop %v1394
    %v1396 = vmul.f32 %v1385, 1.442695
    %v1397 = vpow.pop %v1396
    %v1398 = vmul.f32 %v1386, 1.442695
    %v1399 = vpow.pop %v1398
    %v1400 = vmul.f32 %v1387, 1.442695
    %v1401 = vpow.pop %v1400
    %v1402 = vmul.f32 %v1388, 1.442695
    %v1403 = vpow.pop %v1402
    %v1404 = vmul.f32 %v1389, 1.442695
    %v1405 = vpow.pop %v1404
    %v1407 = vsel %vm100, %v1391, 0
    %v1410 = vsel %vm100, %v1393, 0
    %v1413 = vsel %vm100, %v1395, 0
    %v1416 = vsel %vm100, %v1397, 0
    %v1419 = vsel %vm100, %v1399, 0
    %v1422 = vsel %vm100, %v1401, 0
    %v1425 = vsel %vm100, %v1403, 0
    %v1428 = vsel %vm100, %v1405, 0
    %1430 = vmatprep.subr.mxu0 0.0
    %1431 = vmatpush1.msra.mxu0 0.0
    %1432 = vmatprep.subr.mxu0 0.0
    %1433 = vmatpush1.msra.mxu0 0.0
    %1434 = vmatprep.subr.mxu0 0.0
    %1435 = vmatpush1.msra.mxu0 0.0
    %1436 = vmatprep.subr.mxu0 0.0
    %1437 = vmatpush1.msra.mxu0 0.0
    %1438 = vmatprep.subr.mxu0 0.0
    %1439 = vmatpush1.msra.mxu0 0.0
    %1440 = vmatprep.subr.mxu0 0.0
    %1441 = vmatpush1.msra.mxu0 0.0
    %1442 = vmatprep.subr.mxu0 0.0
    %1443 = vmatpush1.msra.mxu0 0.0
    %1444 = vmatprep.subr.mxu0 0.0
    %1445 = vmatpush1.msra.mxu0 0.0
    %1446 = vmatprep.subr.mxu0 0.0
    %1447 = vmatpush1.msra.mxu0 %v1176
    %1448 = vmatprep.subr.mxu0 0.0
    %1449 = vmatpush1.msra.mxu0 %v1171
    %1450 = vmatprep.subr.mxu0 0.0
    %1451 = vmatpush1.msra.mxu0 %v1166
    %1452 = vmatprep.subr.mxu0 0.0
    %1453 = vmatpush1.msra.mxu0 %v1161
    %1454 = vmatprep.subr.mxu0 0.0
    %1455 = vmatpush1.msra.mxu0 %v1156
    %1456 = vmatprep.subr.mxu0 0.0
    %1457 = vmatpush1.msra.mxu0 %v1151
    %1458 = vmatprep.subr.mxu0 0.0
    %1459 = vmatpush1.msra.mxu0 %v1146
    %1460 = vmatprep.subr.mxu0 0.0
    %1461 = vmatpush1.msra.mxu0 %v1141
    %1462 = vmatprep.subr.mxu0 0.0
    %1463 = vmatpush2.msra.mxu0 0.0
    %1464 = vmatprep.subr.mxu0 0.0
    %1465 = vmatpush2.msra.mxu0 0.0
    %1466 = vmatprep.subr.mxu0 0.0
    %1467 = vmatpush2.msra.mxu0 0.0
    %1468 = vmatprep.subr.mxu0 0.0
    %1469 = vmatpush2.msra.mxu0 0.0
    %1470 = vmatprep.subr.mxu0 0.0
    %1471 = vmatpush2.msra.mxu0 0.0
    %1472 = vmatprep.subr.mxu0 0.0
    %1473 = vmatpush2.msra.mxu0 0.0
    %1474 = vmatprep.subr.mxu0 0.0
    %1475 = vmatpush2.msra.mxu0 0.0
    %1476 = vmatprep.subr.mxu0 0.0
    %1477 = vmatpush2.msra.mxu0 0.0
    %1478 = vmatprep.subr.mxu0 0.0
    %1479 = vmatpush2.msra.mxu0 0.0
    %1480 = vmatprep.subr.mxu0 0.0
    %1481 = vmatpush2.msra.mxu0 0.0
    %1482 = vmatprep.subr.mxu0 0.0
    %1483 = vmatpush2.msra.mxu0 0.0
    %1484 = vmatprep.subr.mxu0 0.0
    %1485 = vmatpush2.msra.mxu0 0.0
    %1486 = vmatprep.subr.mxu0 0.0
    %1487 = vmatpush2.msra.mxu0 0.0
    %1488 = vmatprep.subr.mxu0 0.0
    %1489 = vmatpush2.msra.mxu0 0.0
    %1490 = vmatprep.subr.mxu0 0.0
    %1491 = vmatpush2.msra.mxu0 0.0
    %1492 = vmatprep.subr.mxu0 0.0
    %1493 = vmatpush2.msra.mxu0 0.0
    %1494 = vmatprep.mubr.f32.mxu0 0.0
    %1495 = vmatmul.mubr.f32.gmra.mxu0 %v1407
    %v1496 = vpop.f32.mrf.mxu0
    %v1497 = vadd.f32 0.0, %v1496
    %v1498 = vpop.f32.mrf.mxu0
    %1499 = vmatprep.mubr.f32.mxu0 0.0
    %1500 = vmatmul.mubr.f32.gmra.mxu0 %v1410
    %v1501 = vpop.f32.mrf.mxu0
    %v1502 = vadd.f32 0.0, %v1501
    %v1503 = vpop.f32.mrf.mxu0
    %1504 = vmatprep.mubr.f32.mxu0 0.0
    %1505 = vmatmul.mubr.f32.gmra.mxu0 %v1413
    %v1506 = vpop.f32.mrf.mxu0
    %v1507 = vadd.f32 0.0, %v1506
    %v1508 = vpop.f32.mrf.mxu0
    %1509 = vmatprep.mubr.f32.mxu0 0.0
    %1510 = vmatmul.mubr.f32.gmra.mxu0 %v1416
    %v1511 = vpop.f32.mrf.mxu0
    %v1512 = vadd.f32 0.0, %v1511
    %v1513 = vpop.f32.mrf.mxu0
    %1514 = vmatprep.mubr.f32.mxu0 0.0
    %1515 = vmatmul.mubr.f32.gmra.mxu0 %v1419
    %v1516 = vpop.f32.mrf.mxu0
    %v1517 = vadd.f32 0.0, %v1516
    %v1518 = vpop.f32.mrf.mxu0
    %1519 = vmatprep.mubr.f32.mxu0 0.0
    %1520 = vmatmul.mubr.f32.gmra.mxu0 %v1422
    %v1521 = vpop.f32.mrf.mxu0
    %v1522 = vadd.f32 0.0, %v1521
    %v1523 = vpop.f32.mrf.mxu0
    %1524 = vmatprep.mubr.f32.mxu0 0.0
    %1525 = vmatmul.mubr.f32.gmra.mxu0 %v1425
    %v1526 = vpop.f32.mrf.mxu0
    %v1527 = vadd.f32 0.0, %v1526
    %v1528 = vpop.f32.mrf.mxu0
    %1529 = vmatprep.mubr.f32.mxu0 0.0
    %1530 = vmatmul.mubr.f32.gmra.mxu0 %v1428
    %v1531 = vpop.f32.mrf.mxu0
    %v1532 = vadd.f32 0.0, %v1531
    %v1533 = vpop.f32.mrf.mxu0
    %1534 = vdwg.mxu0
    %v1535 = vsel %vm100, %v1391, 0.0
    %1536 = vadd.xlane.f32.xlu0 %v1535
    %v1537 = vpop.xlane.xlu0 %1536
    %v1538 = vsel %vm100, %v1393, 0.0
    %1539 = vadd.xlane.f32.xlu0 %v1538
    %v1540 = vpop.xlane.xlu0 %1539
    %v1541 = vsel %vm100, %v1395, 0.0
    %1542 = vadd.xlane.f32.xlu0 %v1541
    %v1543 = vpop.xlane.xlu0 %1542
    %v1544 = vsel %vm100, %v1397, 0.0
    %1545 = vadd.xlane.f32.xlu0 %v1544
    %v1546 = vpop.xlane.xlu0 %1545
    %v1547 = vsel %vm100, %v1399, 0.0
    %1548 = vadd.xlane.f32.xlu0 %v1547
    %v1549 = vpop.xlane.xlu0 %1548
    %v1550 = vsel %vm100, %v1401, 0.0
    %1551 = vadd.xlane.f32.xlu0 %v1550
    %v1552 = vpop.xlane.xlu0 %1551
    %v1553 = vsel %vm100, %v1403, 0.0
    %1554 = vadd.xlane.f32.xlu0 %v1553
    %v1555 = vpop.xlane.xlu0 %1554
    %v1556 = vsel %vm100, %v1405, 0.0
    %1557 = vadd.xlane.f32.xlu0 %v1556
    %v1558 = vpop.xlane.xlu0 %1557
    %v1559 = vrcp.pop %v1537
    %v1560 = vrcp.pop %v1540
    %v1561 = vrcp.pop %v1543
    %v1562 = vrcp.pop %v1546
    %v1563 = vrcp.pop %v1549
    %v1564 = vrcp.pop %v1552
    %v1565 = vrcp.pop %v1555
    %v1566 = vrcp.pop %v1558
    %v1567 = vmul.f32 %v1497, %v1559
    %v1568 = vmul.f32 %v1502, %v1560
    %v1569 = vmul.f32 %v1507, %v1561
    %v1570 = vmul.f32 %v1512, %v1562
    %v1571 = vmul.f32 %v1517, %v1563
    %v1572 = vmul.f32 %v1522, %v1564
    %v1573 = vmul.f32 %v1527, %v1565
    %v1574 = vmul.f32 %v1532, %v1566
    %v1575 = vld [vmem:[#allocation2 + $0x70] sm:$0x1]
    %v1576 = vlaneseq
    %v1577 = vshrl.u32 %v1576, 7
    %v1578 = vsub.s32 0, %v1577
    %v1579 = vrot.slane %v1575, %v1578
    %v1580 = vadd.f32 %v1567, %v1579
    %v1581 = vadd.f32 %v1568, %v1579
    %v1582 = vadd.f32 %v1569, %v1579
    %v1583 = vadd.f32 %v1570, %v1579
    %v1584 = vadd.f32 %v1571, %v1579
    %v1585 = vadd.f32 %v1572, %v1579
    %v1586 = vadd.f32 %v1573, %v1579
    %v1587 = vadd.f32 %v1574, %v1579
    %vm1588 = vcmp.gt.f32.partialorder %v1580, 0.0
    %vm1589 = vcmp.gt.f32.partialorder %v1581, 0.0
    %vm1590 = vcmp.gt.f32.partialorder %v1582, 0.0
    %vm1591 = vcmp.gt.f32.partialorder %v1583, 0.0
    %vm1592 = vcmp.gt.f32.partialorder %v1584, 0.0
    %vm1593 = vcmp.gt.f32.partialorder %v1585, 0.0
    %vm1594 = vcmp.gt.f32.partialorder %v1586, 0.0
    %vm1595 = vcmp.gt.f32.partialorder %v1587, 0.0
    %v1596 = vmin.f32 %v1580, 0.0
    %v1597 = vmin.f32 %v1581, 0.0
    %v1598 = vmin.f32 %v1582, 0.0
    %v1599 = vmin.f32 %v1583, 0.0
    %v1600 = vmin.f32 %v1584, 0.0
    %v1601 = vmin.f32 %v1585, 0.0
    %v1602 = vmin.f32 %v1586, 0.0
    %v1603 = vmin.f32 %v1587, 0.0
    %v1604 = vmul.f32 %v1596, 1.442695
    %v1605 = vpow.pop %v1604
    %v1606 = vmul.f32 %v1597, 1.442695
    %v1607 = vpow.pop %v1606
    %v1608 = vmul.f32 %v1598, 1.442695
    %v1609 = vpow.pop %v1608
    %v1610 = vmul.f32 %v1599, 1.442695
    %v1611 = vpow.pop %v1610
    %v1612 = vmul.f32 %v1600, 1.442695
    %v1613 = vpow.pop %v1612
    %v1614 = vmul.f32 %v1601, 1.442695
    %v1615 = vpow.pop %v1614
    %v1616 = vmul.f32 %v1602, 1.442695
    %v1617 = vpow.pop %v1616
    %v1618 = vmul.f32 %v1603, 1.442695
    %v1619 = vpow.pop %v1618
    %v1620 = vsub.f32 %v1605, 1.0
    %v1621 = vsub.f32 %v1607, 1.0
    %v1622 = vsub.f32 %v1609, 1.0
    %v1623 = vsub.f32 %v1611, 1.0
    %v1624 = vsub.f32 %v1613, 1.0
    %v1625 = vsub.f32 %v1615, 1.0
    %v1626 = vsub.f32 %v1617, 1.0
    %v1627 = vsub.f32 %v1619, 1.0
    %v1628 = vsel %vm1588, %v1580, %v1620
    %v1629 = vsel %vm1589, %v1581, %v1621
    %v1630 = vsel %vm1590, %v1582, %v1622
    %v1631 = vsel %vm1591, %v1583, %v1623
    %v1632 = vsel %vm1592, %v1584, %v1624
    %v1633 = vsel %vm1593, %v1585, %v1625
    %v1634 = vsel %vm1594, %v1586, %v1626
    %v1635 = vsel %vm1595, %v1587, %v1627
    %v1636 = vld [vmem:[#allocation2 + $0x78] sm:$0xff]
    %v1637 = vld [vmem:[#allocation2 + $0x80] sm:$0xff]
    %v1638 = vld [vmem:[#allocation2 + $0x88] sm:$0xff]
    %v1639 = vld [vmem:[#allocation2 + $0x90] sm:$0xff]
    %v1640 = vld [vmem:[#allocation2 + $0xb8] sm:$0x1]
    %v1641 = vlaneseq
    %v1642 = vshrl.u32 %v1641, 7
    %v1643 = vsub.s32 0, %v1642
    %v1644 = vrot.slane %v1640, %v1643
    %v1646 = vsel %vm972, %v1628, 0
    %v1649 = vsel %vm972, %v1629, 0
    %v1652 = vsel %vm972, %v1630, 0
    %v1655 = vsel %vm972, %v1631, 0
    %v1658 = vsel %vm972, %v1632, 0
    %v1661 = vsel %vm972, %v1633, 0
    %v1664 = vsel %vm972, %v1634, 0
    %v1667 = vsel %vm972, %v1635, 0
    %1669 = vmatprep.subr.mxu0 0.0
    %1670 = vmatpush1.msra.mxu0 0.0
    %1671 = vmatprep.subr.mxu0 0.0
    %1672 = vmatpush1.msra.mxu0 0.0
    %1673 = vmatprep.subr.mxu0 0.0
    %1674 = vmatpush1.msra.mxu0 0.0
    %1675 = vmatprep.subr.mxu0 0.0
    %1676 = vmatpush1.msra.mxu0 0.0
    %1677 = vmatprep.subr.mxu0 0.0
    %1678 = vmatpush1.msra.mxu0 0.0
    %1679 = vmatprep.subr.mxu0 0.0
    %1680 = vmatpush1.msra.mxu0 0.0
    %1681 = vmatprep.subr.mxu0 0.0
    %1682 = vmatpush1.msra.mxu0 0.0
    %1683 = vmatprep.subr.mxu0 0.0
    %1684 = vmatpush1.msra.mxu0 0.0
    %1685 = vmatprep.subr.mxu0 0.0
    %1686 = vmatpush1.msra.mxu0 0.0
    %1687 = vmatprep.subr.mxu0 0.0
    %1688 = vmatpush1.msra.mxu0 0.0
    %1689 = vmatprep.subr.mxu0 0.0
    %1690 = vmatpush1.msra.mxu0 0.0
    %1691 = vmatprep.subr.mxu0 0.0
    %1692 = vmatpush1.msra.mxu0 0.0
    %1693 = vmatprep.subr.mxu0 0.0
    %1694 = vmatpush1.msra.mxu0 %v1639
    %1695 = vmatprep.subr.mxu0 0.0
    %1696 = vmatpush1.msra.mxu0 %v1638
    %1697 = vmatprep.subr.mxu0 0.0
    %1698 = vmatpush1.msra.mxu0 %v1637
    %1699 = vmatprep.subr.mxu0 0.0
    %1700 = vmatpush1.msra.mxu0 %v1636
    %1701 = vmatprep.subr.mxu0 0.0
    %1702 = vmatpush2.msra.mxu0 0.0
    %1703 = vmatprep.subr.mxu0 0.0
    %1704 = vmatpush2.msra.mxu0 0.0
    %1705 = vmatprep.subr.mxu0 0.0
    %1706 = vmatpush2.msra.mxu0 0.0
    %1707 = vmatprep.subr.mxu0 0.0
    %1708 = vmatpush2.msra.mxu0 0.0
    %1709 = vmatprep.subr.mxu0 0.0
    %1710 = vmatpush2.msra.mxu0 0.0
    %1711 = vmatprep.subr.mxu0 0.0
    %1712 = vmatpush2.msra.mxu0 0.0
    %1713 = vmatprep.subr.mxu0 0.0
    %1714 = vmatpush2.msra.mxu0 0.0
    %1715 = vmatprep.subr.mxu0 0.0
    %1716 = vmatpush2.msra.mxu0 0.0
    %1717 = vmatprep.subr.mxu0 0.0
    %1718 = vmatpush2.msra.mxu0 0.0
    %1719 = vmatprep.subr.mxu0 0.0
    %1720 = vmatpush2.msra.mxu0 0.0
    %1721 = vmatprep.subr.mxu0 0.0
    %1722 = vmatpush2.msra.mxu0 0.0
    %1723 = vmatprep.subr.mxu0 0.0
    %1724 = vmatpush2.msra.mxu0 0.0
    %1725 = vmatprep.subr.mxu0 0.0
    %1726 = vmatpush2.msra.mxu0 0.0
    %1727 = vmatprep.subr.mxu0 0.0
    %1728 = vmatpush2.msra.mxu0 0.0
    %1729 = vmatprep.subr.mxu0 0.0
    %1730 = vmatpush2.msra.mxu0 0.0
    %1731 = vmatprep.subr.mxu0 0.0
    %1732 = vmatpush2.msra.mxu0 0.0
    %1733 = vmatprep.mubr.f32.mxu0 0.0
    %1734 = vmatmul.mubr.f32.gmra.mxu0 %v1646
    %v1735 = vpop.f32.mrf.mxu0
    %v1736 = vadd.f32 %v1644, %v1735
    %v1737 = vpop.f32.mrf.mxu0
    %1738 = vmatprep.mubr.f32.mxu0 0.0
    %1739 = vmatmul.mubr.f32.gmra.mxu0 %v1649
    %v1740 = vpop.f32.mrf.mxu0
    %v1741 = vadd.f32 %v1644, %v1740
    %v1742 = vpop.f32.mrf.mxu0
    %1743 = vmatprep.mubr.f32.mxu0 0.0
    %1744 = vmatmul.mubr.f32.gmra.mxu0 %v1652
    %v1745 = vpop.f32.mrf.mxu0
    %v1746 = vadd.f32 %v1644, %v1745
    %v1747 = vpop.f32.mrf.mxu0
    %1748 = vmatprep.mubr.f32.mxu0 0.0
    %1749 = vmatmul.mubr.f32.gmra.mxu0 %v1655
    %v1750 = vpop.f32.mrf.mxu0
    %v1751 = vadd.f32 %v1644, %v1750
    %v1752 = vpop.f32.mrf.mxu0
    %1753 = vmatprep.mubr.f32.mxu0 0.0
    %1754 = vmatmul.mubr.f32.gmra.mxu0 %v1658
    %v1755 = vpop.f32.mrf.mxu0
    %v1756 = vadd.f32 %v1644, %v1755
    %v1757 = vpop.f32.mrf.mxu0
    %1758 = vmatprep.mubr.f32.mxu0 0.0
    %1759 = vmatmul.mubr.f32.gmra.mxu0 %v1661
    %v1760 = vpop.f32.mrf.mxu0
    %v1761 = vadd.f32 %v1644, %v1760
    %v1762 = vpop.f32.mrf.mxu0
    %1763 = vmatprep.mubr.f32.mxu0 0.0
    %1764 = vmatmul.mubr.f32.gmra.mxu0 %v1664
    %v1765 = vpop.f32.mrf.mxu0
    %v1766 = vadd.f32 %v1644, %v1765
    %v1767 = vpop.f32.mrf.mxu0
    %1768 = vmatprep.mubr.f32.mxu0 0.0
    %1769 = vmatmul.mubr.f32.gmra.mxu0 %v1667
    %v1770 = vpop.f32.mrf.mxu0
    %v1771 = vadd.f32 %v1644, %v1770
    %v1772 = vpop.f32.mrf.mxu0
    %1773 = vdwg.mxu0
    %v1774 = vld [vmem:[#allocation2 + $0x98] sm:$0xff]
    %v1775 = vld [vmem:[#allocation2 + $0xa0] sm:$0xff]
    %v1776 = vld [vmem:[#allocation2 + $0xa8] sm:$0xff]
    %v1777 = vld [vmem:[#allocation2 + $0xb0] sm:$0xff]
    %v1778 = vld [vmem:[#allocation2 + $0xc0] sm:$0x1]
    %v1779 = vlaneseq
    %v1780 = vshrl.u32 %v1779, 7
    %v1781 = vsub.s32 0, %v1780
    %v1782 = vrot.slane %v1778, %v1781
    %v1784 = vsel %vm972, 0.0, 0
    %1786 = vmatprep.subr.mxu0 0.0
    %1787 = vmatpush1.msra.mxu0 0.0
    %1788 = vmatprep.subr.mxu0 0.0
    %1789 = vmatpush1.msra.mxu0 0.0
    %1790 = vmatprep.subr.mxu0 0.0
    %1791 = vmatpush1.msra.mxu0 0.0
    %1792 = vmatprep.subr.mxu0 0.0
    %1793 = vmatpush1.msra.mxu0 0.0
    %1794 = vmatprep.subr.mxu0 0.0
    %1795 = vmatpush1.msra.mxu0 0.0
    %1796 = vmatprep.subr.mxu0 0.0
    %1797 = vmatpush1.msra.mxu0 0.0
    %1798 = vmatprep.subr.mxu0 0.0
    %1799 = vmatpush1.msra.mxu0 0.0
    %1800 = vmatprep.subr.mxu0 0.0
    %1801 = vmatpush1.msra.mxu0 0.0
    %1802 = vmatprep.subr.mxu0 0.0
    %1803 = vmatpush1.msra.mxu0 0.0
    %1804 = vmatprep.subr.mxu0 0.0
    %1805 = vmatpush1.msra.mxu0 0.0
    %1806 = vmatprep.subr.mxu0 0.0
    %1807 = vmatpush1.msra.mxu0 0.0
    %1808 = vmatprep.subr.mxu0 0.0
    %1809 = vmatpush1.msra.mxu0 0.0
    %1810 = vmatprep.subr.mxu0 0.0
    %1811 = vmatpush1.msra.mxu0 %v1777
    %1812 = vmatprep.subr.mxu0 0.0
    %1813 = vmatpush1.msra.mxu0 %v1776
    %1814 = vmatprep.subr.mxu0 0.0
    %1815 = vmatpush1.msra.mxu0 %v1775
    %1816 = vmatprep.subr.mxu0 0.0
    %1817 = vmatpush1.msra.mxu0 %v1774
    %1818 = vmatprep.subr.mxu0 0.0
    %1819 = vmatpush2.msra.mxu0 0.0
    %1820 = vmatprep.subr.mxu0 0.0
    %1821 = vmatpush2.msra.mxu0 0.0
    %1822 = vmatprep.subr.mxu0 0.0
    %1823 = vmatpush2.msra.mxu0 0.0
    %1824 = vmatprep.subr.mxu0 0.0
    %1825 = vmatpush2.msra.mxu0 0.0
    %1826 = vmatprep.subr.mxu0 0.0
    %1827 = vmatpush2.msra.mxu0 0.0
    %1828 = vmatprep.subr.mxu0 0.0
    %1829 = vmatpush2.msra.mxu0 0.0
    %1830 = vmatprep.subr.mxu0 0.0
    %1831 = vmatpush2.msra.mxu0 0.0
    %1832 = vmatprep.subr.mxu0 0.0
    %1833 = vmatpush2.msra.mxu0 0.0
    %1834 = vmatprep.subr.mxu0 0.0
    %1835 = vmatpush2.msra.mxu0 0.0
    %1836 = vmatprep.subr.mxu0 0.0
    %1837 = vmatpush2.msra.mxu0 0.0
    %1838 = vmatprep.subr.mxu0 0.0
    %1839 = vmatpush2.msra.mxu0 0.0
    %1840 = vmatprep.subr.mxu0 0.0
    %1841 = vmatpush2.msra.mxu0 0.0
    %1842 = vmatprep.subr.mxu0 0.0
    %1843 = vmatpush2.msra.mxu0 0.0
    %1844 = vmatprep.subr.mxu0 0.0
    %1845 = vmatpush2.msra.mxu0 0.0
    %1846 = vmatprep.subr.mxu0 0.0
    %1847 = vmatpush2.msra.mxu0 0.0
    %1848 = vmatprep.subr.mxu0 0.0
    %1849 = vmatpush2.msra.mxu0 0.0
    %1850 = vmatprep.mubr.f32.mxu0 0.0
    %1851 = vmatmul.mubr.f32.gmra.mxu0 %v1784
    %v1852 = vpop.f32.mrf.mxu0
    %v1853 = vadd.f32 %v1782, %v1852
    %v1854 = vpop.f32.mrf.mxu0
    %1855 = vdwg.mxu0
    %v1856 = vadd.f32 %v1736, %v1853
    %v1857 = vmul.f32 %v1856, 0.5
    %v1858 = vtanh.pop %v1857
    %v1859 = vadd.f32 %v1858, 1.0
    %v1860 = vmul.f32 %v1859, 0.5
    %1862 = vrot.lane.b32.xlu0 %v1853, 64
    %v1863 = vpop.permute.xlu0 %1862
    %v1865 = vmul.f32 %v1860, %v1863
    %1867 = vrot.lane.b32.xlu0 %v1865, 64
    %v1868 = vpop.permute.xlu0 %1867
    %v1870 = vadd.f32 %v1736, %v1868
    %v1871 = vtanh.pop %v1870
    %v1872 = vsub.f32 0.0, %v1871
    %1874 = vrot.lane.b32.xlu0 %v1872, 96
    %v1875 = vpop.permute.xlu0 %1874
    %v1877 = vmul.f32 %v1860, %v1875
    %1879 = vrot.lane.b32.xlu0 %v1877, 32
    %v1880 = vpop.permute.xlu0 %1879
    %v1882 = vadd.f32 %v1871, %v1880
    %1884 = vrot.lane.b32.xlu0 %v1882, 64
    %v1885 = vpop.permute.xlu0 %1884
    %v1886 = vsel %vm972, %v1885, 0
    %1888 = vmatprep.subr.mxu0 0.0
    %1889 = vmatpush1.msra.mxu0 0.0
    %1890 = vmatprep.subr.mxu0 0.0
    %1891 = vmatpush1.msra.mxu0 0.0
    %1892 = vmatprep.subr.mxu0 0.0
    %1893 = vmatpush1.msra.mxu0 0.0
    %1894 = vmatprep.subr.mxu0 0.0
    %1895 = vmatpush1.msra.mxu0 0.0
    %1896 = vmatprep.subr.mxu0 0.0
    %1897 = vmatpush1.msra.mxu0 0.0
    %1898 = vmatprep.subr.mxu0 0.0
    %1899 = vmatpush1.msra.mxu0 0.0
    %1900 = vmatprep.subr.mxu0 0.0
    %1901 = vmatpush1.msra.mxu0 0.0
    %1902 = vmatprep.subr.mxu0 0.0
    %1903 = vmatpush1.msra.mxu0 0.0
    %1904 = vmatprep.subr.mxu0 0.0
    %1905 = vmatpush1.msra.mxu0 0.0
    %1906 = vmatprep.subr.mxu0 0.0
    %1907 = vmatpush1.msra.mxu0 0.0
    %1908 = vmatprep.subr.mxu0 0.0
    %1909 = vmatpush1.msra.mxu0 0.0
    %1910 = vmatprep.subr.mxu0 0.0
    %1911 = vmatpush1.msra.mxu0 0.0
    %1912 = vmatprep.subr.mxu0 0.0
    %1913 = vmatpush1.msra.mxu0 %v1777
    %1914 = vmatprep.subr.mxu0 0.0
    %1915 = vmatpush1.msra.mxu0 %v1776
    %1916 = vmatprep.subr.mxu0 0.0
    %1917 = vmatpush1.msra.mxu0 %v1775
    %1918 = vmatprep.subr.mxu0 0.0
    %1919 = vmatpush1.msra.mxu0 %v1774
    %1920 = vmatprep.subr.mxu0 0.0
    %1921 = vmatpush2.msra.mxu0 0.0
    %1922 = vmatprep.subr.mxu0 0.0
    %1923 = vmatpush2.msra.mxu0 0.0
    %1924 = vmatprep.subr.mxu0 0.0
    %1925 = vmatpush2.msra.mxu0 0.0
    %1926 = vmatprep.subr.mxu0 0.0
    %1927 = vmatpush2.msra.mxu0 0.0
    %1928 = vmatprep.subr.mxu0 0.0
    %1929 = vmatpush2.msra.mxu0 0.0
    %1930 = vmatprep.subr.mxu0 0.0
    %1931 = vmatpush2.msra.mxu0 0.0
    %1932 = vmatprep.subr.mxu0 0.0
    %1933 = vmatpush2.msra.mxu0 0.0
    %1934 = vmatprep.subr.mxu0 0.0
    %1935 = vmatpush2.msra.mxu0 0.0
    %1936 = vmatprep.subr.mxu0 0.0
    %1937 = vmatpush2.msra.mxu0 0.0
    %1938 = vmatprep.subr.mxu0 0.0
    %1939 = vmatpush2.msra.mxu0 0.0
    %1940 = vmatprep.subr.mxu0 0.0
    %1941 = vmatpush2.msra.mxu0 0.0
    %1942 = vmatprep.subr.mxu0 0.0
    %1943 = vmatpush2.msra.mxu0 0.0
    %1944 = vmatprep.subr.mxu0 0.0
    %1945 = vmatpush2.msra.mxu0 0.0
    %1946 = vmatprep.subr.mxu0 0.0
    %1947 = vmatpush2.msra.mxu0 0.0
    %1948 = vmatprep.subr.mxu0 0.0
    %1949 = vmatpush2.msra.mxu0 0.0
    %1950 = vmatprep.subr.mxu0 0.0
    %1951 = vmatpush2.msra.mxu0 0.0
    %1952 = vmatprep.mubr.f32.mxu0 0.0
    %1953 = vmatmul.mubr.f32.gmra.mxu0 %v1886
    %v1954 = vpop.f32.mrf.mxu0
    %v1955 = vadd.f32 %v1782, %v1954
    %v1956 = vpop.f32.mrf.mxu0
    %1957 = vdwg.mxu0
    %v1958 = vadd.f32 %v1741, %v1955
    %v1959 = vmul.f32 %v1958, 0.5
    %v1960 = vtanh.pop %v1959
    %v1961 = vadd.f32 %v1960, 1.0
    %v1962 = vmul.f32 %v1961, 0.5
    %1964 = vrot.lane.b32.xlu0 %v1955, 64
    %v1965 = vpop.permute.xlu0 %1964
    %v1967 = vmul.f32 %v1962, %v1965
    %1969 = vrot.lane.b32.xlu0 %v1967, 64
    %v1970 = vpop.permute.xlu0 %1969
    %v1972 = vadd.f32 %v1741, %v1970
    %v1973 = vtanh.pop %v1972
    %v1974 = vsub.f32 %v1882, %v1973
    %1976 = vrot.lane.b32.xlu0 %v1974, 96
    %v1977 = vpop.permute.xlu0 %1976
    %v1979 = vmul.f32 %v1962, %v1977
    %1981 = vrot.lane.b32.xlu0 %v1979, 32
    %v1982 = vpop.permute.xlu0 %1981
    %v1984 = vadd.f32 %v1973, %v1982
    %1986 = vrot.lane.b32.xlu0 %v1984, 64
    %v1987 = vpop.permute.xlu0 %1986
    %v1988 = vsel %vm972, %v1987, 0
    %1990 = vmatprep.subr.mxu0 0.0
    %1991 = vmatpush1.msra.mxu0 0.0
    %1992 = vmatprep.subr.mxu0 0.0
    %1993 = vmatpush1.msra.mxu0 0.0
    %1994 = vmatprep.subr.mxu0 0.0
    %1995 = vmatpush1.msra.mxu0 0.0
    %1996 = vmatprep.subr.mxu0 0.0
    %1997 = vmatpush1.msra.mxu0 0.0
    %1998 = vmatprep.subr.mxu0 0.0
    %1999 = vmatpush1.msra.mxu0 0.0
    %2000 = vmatprep.subr.mxu0 0.0
    %2001 = vmatpush1.msra.mxu0 0.0
    %2002 = vmatprep.subr.mxu0 0.0
    %2003 = vmatpush1.msra.mxu0 0.0
    %2004 = vmatprep.subr.mxu0 0.0
    %2005 = vmatpush1.msra.mxu0 0.0
    %2006 = vmatprep.subr.mxu0 0.0
    %2007 = vmatpush1.msra.mxu0 0.0
    %2008 = vmatprep.subr.mxu0 0.0
    %2009 = vmatpush1.msra.mxu0 0.0
    %2010 = vmatprep.subr.mxu0 0.0
    %2011 = vmatpush1.msra.mxu0 0.0
    %2012 = vmatprep.subr.mxu0 0.0
    %2013 = vmatpush1.msra.mxu0 0.0
    %2014 = vmatprep.subr.mxu0 0.0
    %2015 = vmatpush1.msra.mxu0 %v1777
    %2016 = vmatprep.subr.mxu0 0.0
    %2017 = vmatpush1.msra.mxu0 %v1776
    %2018 = vmatprep.subr.mxu0 0.0
    %2019 = vmatpush1.msra.mxu0 %v1775
    %2020 = vmatprep.subr.mxu0 0.0
    %2021 = vmatpush1.msra.mxu0 %v1774
    %2022 = vmatprep.subr.mxu0 0.0
    %2023 = vmatpush2.msra.mxu0 0.0
    %2024 = vmatprep.subr.mxu0 0.0
    %2025 = vmatpush2.msra.mxu0 0.0
    %2026 = vmatprep.subr.mxu0 0.0
    %2027 = vmatpush2.msra.mxu0 0.0
    %2028 = vmatprep.subr.mxu0 0.0
    %2029 = vmatpush2.msra.mxu0 0.0
    %2030 = vmatprep.subr.mxu0 0.0
    %2031 = vmatpush2.msra.mxu0 0.0
    %2032 = vmatprep.subr.mxu0 0.0
    %2033 = vmatpush2.msra.mxu0 0.0
    %2034 = vmatprep.subr.mxu0 0.0
    %2035 = vmatpush2.msra.mxu0 0.0
    %2036 = vmatprep.subr.mxu0 0.0
    %2037 = vmatpush2.msra.mxu0 0.0
    %2038 = vmatprep.subr.mxu0 0.0
    %2039 = vmatpush2.msra.mxu0 0.0
    %2040 = vmatprep.subr.mxu0 0.0
    %2041 = vmatpush2.msra.mxu0 0.0
    %2042 = vmatprep.subr.mxu0 0.0
    %2043 = vmatpush2.msra.mxu0 0.0
    %2044 = vmatprep.subr.mxu0 0.0
    %2045 = vmatpush2.msra.mxu0 0.0
    %2046 = vmatprep.subr.mxu0 0.0
    %2047 = vmatpush2.msra.mxu0 0.0
    %2048 = vmatprep.subr.mxu0 0.0
    %2049 = vmatpush2.msra.mxu0 0.0
    %2050 = vmatprep.subr.mxu0 0.0
    %2051 = vmatpush2.msra.mxu0 0.0
    %2052 = vmatprep.subr.mxu0 0.0
    %2053 = vmatpush2.msra.mxu0 0.0
    %2054 = vmatprep.mubr.f32.mxu0 0.0
    %2055 = vmatmul.mubr.f32.gmra.mxu0 %v1988
    %v2056 = vpop.f32.mrf.mxu0
    %v2057 = vadd.f32 %v1782, %v2056
    %v2058 = vpop.f32.mrf.mxu0
    %2059 = vdwg.mxu0
    %v2060 = vadd.f32 %v1746, %v2057
    %v2061 = vmul.f32 %v2060, 0.5
    %v2062 = vtanh.pop %v2061
    %v2063 = vadd.f32 %v2062, 1.0
    %v2064 = vmul.f32 %v2063, 0.5
    %2066 = vrot.lane.b32.xlu0 %v2057, 64
    %v2067 = vpop.permute.xlu0 %2066
    %v2069 = vmul.f32 %v2064, %v2067
    %2071 = vrot.lane.b32.xlu0 %v2069, 64
    %v2072 = vpop.permute.xlu0 %2071
    %v2074 = vadd.f32 %v1746, %v2072
    %v2075 = vtanh.pop %v2074
    %v2076 = vsub.f32 %v1984, %v2075
    %2078 = vrot.lane.b32.xlu0 %v2076, 96
    %v2079 = vpop.permute.xlu0 %2078
    %v2081 = vmul.f32 %v2064, %v2079
    %2083 = vrot.lane.b32.xlu0 %v2081, 32
    %v2084 = vpop.permute.xlu0 %2083
    %v2086 = vadd.f32 %v2075, %v2084
    %2088 = vrot.lane.b32.xlu0 %v2086, 64
    %v2089 = vpop.permute.xlu0 %2088
    %v2090 = vsel %vm972, %v2089, 0
    %2092 = vmatprep.subr.mxu0 0.0
    %2093 = vmatpush1.msra.mxu0 0.0
    %2094 = vmatprep.subr.mxu0 0.0
    %2095 = vmatpush1.msra.mxu0 0.0
    %2096 = vmatprep.subr.mxu0 0.0
    %2097 = vmatpush1.msra.mxu0 0.0
    %2098 = vmatprep.subr.mxu0 0.0
    %2099 = vmatpush1.msra.mxu0 0.0
    %2100 = vmatprep.subr.mxu0 0.0
    %2101 = vmatpush1.msra.mxu0 0.0
    %2102 = vmatprep.subr.mxu0 0.0
    %2103 = vmatpush1.msra.mxu0 0.0
    %2104 = vmatprep.subr.mxu0 0.0
    %2105 = vmatpush1.msra.mxu0 0.0
    %2106 = vmatprep.subr.mxu0 0.0
    %2107 = vmatpush1.msra.mxu0 0.0
    %2108 = vmatprep.subr.mxu0 0.0
    %2109 = vmatpush1.msra.mxu0 0.0
    %2110 = vmatprep.subr.mxu0 0.0
    %2111 = vmatpush1.msra.mxu0 0.0
    %2112 = vmatprep.subr.mxu0 0.0
    %2113 = vmatpush1.msra.mxu0 0.0
    %2114 = vmatprep.subr.mxu0 0.0
    %2115 = vmatpush1.msra.mxu0 0.0
    %2116 = vmatprep.subr.mxu0 0.0
    %2117 = vmatpush1.msra.mxu0 %v1777
    %2118 = vmatprep.subr.mxu0 0.0
    %2119 = vmatpush1.msra.mxu0 %v1776
    %2120 = vmatprep.subr.mxu0 0.0
    %2121 = vmatpush1.msra.mxu0 %v1775
    %2122 = vmatprep.subr.mxu0 0.0
    %2123 = vmatpush1.msra.mxu0 %v1774
    %2124 = vmatprep.subr.mxu0 0.0
    %2125 = vmatpush2.msra.mxu0 0.0
    %2126 = vmatprep.subr.mxu0 0.0
    %2127 = vmatpush2.msra.mxu0 0.0
    %2128 = vmatprep.subr.mxu0 0.0
    %2129 = vmatpush2.msra.mxu0 0.0
    %2130 = vmatprep.subr.mxu0 0.0
    %2131 = vmatpush2.msra.mxu0 0.0
    %2132 = vmatprep.subr.mxu0 0.0
    %2133 = vmatpush2.msra.mxu0 0.0
    %2134 = vmatprep.subr.mxu0 0.0
    %2135 = vmatpush2.msra.mxu0 0.0
    %2136 = vmatprep.subr.mxu0 0.0
    %2137 = vmatpush2.msra.mxu0 0.0
    %2138 = vmatprep.subr.mxu0 0.0
    %2139 = vmatpush2.msra.mxu0 0.0
    %2140 = vmatprep.subr.mxu0 0.0
    %2141 = vmatpush2.msra.mxu0 0.0
    %2142 = vmatprep.subr.mxu0 0.0
    %2143 = vmatpush2.msra.mxu0 0.0
    %2144 = vmatprep.subr.mxu0 0.0
    %2145 = vmatpush2.msra.mxu0 0.0
    %2146 = vmatprep.subr.mxu0 0.0
    %2147 = vmatpush2.msra.mxu0 0.0
    %2148 = vmatprep.subr.mxu0 0.0
    %2149 = vmatpush2.msra.mxu0 0.0
    %2150 = vmatprep.subr.mxu0 0.0
    %2151 = vmatpush2.msra.mxu0 0.0
    %2152 = vmatprep.subr.mxu0 0.0
    %2153 = vmatpush2.msra.mxu0 0.0
    %2154 = vmatprep.subr.mxu0 0.0
    %2155 = vmatpush2.msra.mxu0 0.0
    %2156 = vmatprep.mubr.f32.mxu0 0.0
    %2157 = vmatmul.mubr.f32.gmra.mxu0 %v2090
    %v2158 = vpop.f32.mrf.mxu0
    %v2159 = vadd.f32 %v1782, %v2158
    %v2160 = vpop.f32.mrf.mxu0
    %2161 = vdwg.mxu0
    %v2162 = vadd.f32 %v1751, %v2159
    %v2163 = vmul.f32 %v2162, 0.5
    %v2164 = vtanh.pop %v2163
    %v2165 = vadd.f32 %v2164, 1.0
    %v2166 = vmul.f32 %v2165, 0.5
    %2168 = vrot.lane.b32.xlu0 %v2159, 64
    %v2169 = vpop.permute.xlu0 %2168
    %v2171 = vmul.f32 %v2166, %v2169
    %2173 = vrot.lane.b32.xlu0 %v2171, 64
    %v2174 = vpop.permute.xlu0 %2173
    %v2176 = vadd.f32 %v1751, %v2174
    %v2177 = vtanh.pop %v2176
    %v2178 = vsub.f32 %v2086, %v2177
    %2180 = vrot.lane.b32.xlu0 %v2178, 96
    %v2181 = vpop.permute.xlu0 %2180
    %v2183 = vmul.f32 %v2166, %v2181
    %2185 = vrot.lane.b32.xlu0 %v2183, 32
    %v2186 = vpop.permute.xlu0 %2185
    %v2188 = vadd.f32 %v2177, %v2186
    %2190 = vrot.lane.b32.xlu0 %v2188, 64
    %v2191 = vpop.permute.xlu0 %2190
    %v2192 = vsel %vm972, %v2191, 0
    %2194 = vmatprep.subr.mxu0 0.0
    %2195 = vmatpush1.msra.mxu0 0.0
    %2196 = vmatprep.subr.mxu0 0.0
    %2197 = vmatpush1.msra.mxu0 0.0
    %2198 = vmatprep.subr.mxu0 0.0
    %2199 = vmatpush1.msra.mxu0 0.0
    %2200 = vmatprep.subr.mxu0 0.0
    %2201 = vmatpush1.msra.mxu0 0.0
    %2202 = vmatprep.subr.mxu0 0.0
    %2203 = vmatpush1.msra.mxu0 0.0
    %2204 = vmatprep.subr.mxu0 0.0
    %2205 = vmatpush1.msra.mxu0 0.0
    %2206 = vmatprep.subr.mxu0 0.0
    %2207 = vmatpush1.msra.mxu0 0.0
    %2208 = vmatprep.subr.mxu0 0.0
    %2209 = vmatpush1.msra.mxu0 0.0
    %2210 = vmatprep.subr.mxu0 0.0
    %2211 = vmatpush1.msra.mxu0 0.0
    %2212 = vmatprep.subr.mxu0 0.0
    %2213 = vmatpush1.msra.mxu0 0.0
    %2214 = vmatprep.subr.mxu0 0.0
    %2215 = vmatpush1.msra.mxu0 0.0
    %2216 = vmatprep.subr.mxu0 0.0
    %2217 = vmatpush1.msra.mxu0 0.0
    %2218 = vmatprep.subr.mxu0 0.0
    %2219 = vmatpush1.msra.mxu0 %v1777
    %2220 = vmatprep.subr.mxu0 0.0
    %2221 = vmatpush1.msra.mxu0 %v1776
    %2222 = vmatprep.subr.mxu0 0.0
    %2223 = vmatpush1.msra.mxu0 %v1775
    %2224 = vmatprep.subr.mxu0 0.0
    %2225 = vmatpush1.msra.mxu0 %v1774
    %2226 = vmatprep.subr.mxu0 0.0
    %2227 = vmatpush2.msra.mxu0 0.0
    %2228 = vmatprep.subr.mxu0 0.0
    %2229 = vmatpush2.msra.mxu0 0.0
    %2230 = vmatprep.subr.mxu0 0.0
    %2231 = vmatpush2.msra.mxu0 0.0
    %2232 = vmatprep.subr.mxu0 0.0
    %2233 = vmatpush2.msra.mxu0 0.0
    %2234 = vmatprep.subr.mxu0 0.0
    %2235 = vmatpush2.msra.mxu0 0.0
    %2236 = vmatprep.subr.mxu0 0.0
    %2237 = vmatpush2.msra.mxu0 0.0
    %2238 = vmatprep.subr.mxu0 0.0
    %2239 = vmatpush2.msra.mxu0 0.0
    %2240 = vmatprep.subr.mxu0 0.0
    %2241 = vmatpush2.msra.mxu0 0.0
    %2242 = vmatprep.subr.mxu0 0.0
    %2243 = vmatpush2.msra.mxu0 0.0
    %2244 = vmatprep.subr.mxu0 0.0
    %2245 = vmatpush2.msra.mxu0 0.0
    %2246 = vmatprep.subr.mxu0 0.0
    %2247 = vmatpush2.msra.mxu0 0.0
    %2248 = vmatprep.subr.mxu0 0.0
    %2249 = vmatpush2.msra.mxu0 0.0
    %2250 = vmatprep.subr.mxu0 0.0
    %2251 = vmatpush2.msra.mxu0 0.0
    %2252 = vmatprep.subr.mxu0 0.0
    %2253 = vmatpush2.msra.mxu0 0.0
    %2254 = vmatprep.subr.mxu0 0.0
    %2255 = vmatpush2.msra.mxu0 0.0
    %2256 = vmatprep.subr.mxu0 0.0
    %2257 = vmatpush2.msra.mxu0 0.0
    %2258 = vmatprep.mubr.f32.mxu0 0.0
    %2259 = vmatmul.mubr.f32.gmra.mxu0 %v2192
    %v2260 = vpop.f32.mrf.mxu0
    %v2261 = vadd.f32 %v1782, %v2260
    %v2262 = vpop.f32.mrf.mxu0
    %2263 = vdwg.mxu0
    %v2264 = vadd.f32 %v1756, %v2261
    %v2265 = vmul.f32 %v2264, 0.5
    %v2266 = vtanh.pop %v2265
    %v2267 = vadd.f32 %v2266, 1.0
    %v2268 = vmul.f32 %v2267, 0.5
    %2270 = vrot.lane.b32.xlu0 %v2261, 64
    %v2271 = vpop.permute.xlu0 %2270
    %v2273 = vmul.f32 %v2268, %v2271
    %2275 = vrot.lane.b32.xlu0 %v2273, 64
    %v2276 = vpop.permute.xlu0 %2275
    %v2278 = vadd.f32 %v1756, %v2276
    %v2279 = vtanh.pop %v2278
    %v2280 = vsub.f32 %v2188, %v2279
    %2282 = vrot.lane.b32.xlu0 %v2280, 96
    %v2283 = vpop.permute.xlu0 %2282
    %v2285 = vmul.f32 %v2268, %v2283
    %2287 = vrot.lane.b32.xlu0 %v2285, 32
    %v2288 = vpop.permute.xlu0 %2287
    %v2290 = vadd.f32 %v2279, %v2288
    %2292 = vrot.lane.b32.xlu0 %v2290, 64
    %v2293 = vpop.permute.xlu0 %2292
    %v2294 = vsel %vm972, %v2293, 0
    %2296 = vmatprep.subr.mxu0 0.0
    %2297 = vmatpush1.msra.mxu0 0.0
    %2298 = vmatprep.subr.mxu0 0.0
    %2299 = vmatpush1.msra.mxu0 0.0
    %2300 = vmatprep.subr.mxu0 0.0
    %2301 = vmatpush1.msra.mxu0 0.0
    %2302 = vmatprep.subr.mxu0 0.0
    %2303 = vmatpush1.msra.mxu0 0.0
    %2304 = vmatprep.subr.mxu0 0.0
    %2305 = vmatpush1.msra.mxu0 0.0
    %2306 = vmatprep.subr.mxu0 0.0
    %2307 = vmatpush1.msra.mxu0 0.0
    %2308 = vmatprep.subr.mxu0 0.0
    %2309 = vmatpush1.msra.mxu0 0.0
    %2310 = vmatprep.subr.mxu0 0.0
    %2311 = vmatpush1.msra.mxu0 0.0
    %2312 = vmatprep.subr.mxu0 0.0
    %2313 = vmatpush1.msra.mxu0 0.0
    %2314 = vmatprep.subr.mxu0 0.0
    %2315 = vmatpush1.msra.mxu0 0.0
    %2316 = vmatprep.subr.mxu0 0.0
    %2317 = vmatpush1.msra.mxu0 0.0
    %2318 = vmatprep.subr.mxu0 0.0
    %2319 = vmatpush1.msra.mxu0 0.0
    %2320 = vmatprep.subr.mxu0 0.0
    %2321 = vmatpush1.msra.mxu0 %v1777
    %2322 = vmatprep.subr.mxu0 0.0
    %2323 = vmatpush1.msra.mxu0 %v1776
    %2324 = vmatprep.subr.mxu0 0.0
    %2325 = vmatpush1.msra.mxu0 %v1775
    %2326 = vmatprep.subr.mxu0 0.0
    %2327 = vmatpush1.msra.mxu0 %v1774
    %2328 = vmatprep.subr.mxu0 0.0
    %2329 = vmatpush2.msra.mxu0 0.0
    %2330 = vmatprep.subr.mxu0 0.0
    %2331 = vmatpush2.msra.mxu0 0.0
    %2332 = vmatprep.subr.mxu0 0.0
    %2333 = vmatpush2.msra.mxu0 0.0
    %2334 = vmatprep.subr.mxu0 0.0
    %2335 = vmatpush2.msra.mxu0 0.0
    %2336 = vmatprep.subr.mxu0 0.0
    %2337 = vmatpush2.msra.mxu0 0.0
    %2338 = vmatprep.subr.mxu0 0.0
    %2339 = vmatpush2.msra.mxu0 0.0
    %2340 = vmatprep.subr.mxu0 0.0
    %2341 = vmatpush2.msra.mxu0 0.0
    %2342 = vmatprep.subr.mxu0 0.0
    %2343 = vmatpush2.msra.mxu0 0.0
    %2344 = vmatprep.subr.mxu0 0.0
    %2345 = vmatpush2.msra.mxu0 0.0
    %2346 = vmatprep.subr.mxu0 0.0
    %2347 = vmatpush2.msra.mxu0 0.0
    %2348 = vmatprep.subr.mxu0 0.0
    %2349 = vmatpush2.msra.mxu0 0.0
    %2350 = vmatprep.subr.mxu0 0.0
    %2351 = vmatpush2.msra.mxu0 0.0
    %2352 = vmatprep.subr.mxu0 0.0
    %2353 = vmatpush2.msra.mxu0 0.0
    %2354 = vmatprep.subr.mxu0 0.0
    %2355 = vmatpush2.msra.mxu0 0.0
    %2356 = vmatprep.subr.mxu0 0.0
    %2357 = vmatpush2.msra.mxu0 0.0
    %2358 = vmatprep.subr.mxu0 0.0
    %2359 = vmatpush2.msra.mxu0 0.0
    %2360 = vmatprep.mubr.f32.mxu0 0.0
    %2361 = vmatmul.mubr.f32.gmra.mxu0 %v2294
    %v2362 = vpop.f32.mrf.mxu0
    %v2363 = vadd.f32 %v1782, %v2362
    %v2364 = vpop.f32.mrf.mxu0
    %2365 = vdwg.mxu0
    %v2366 = vadd.f32 %v1761, %v2363
    %v2367 = vmul.f32 %v2366, 0.5
    %v2368 = vtanh.pop %v2367
    %v2369 = vadd.f32 %v2368, 1.0
    %v2370 = vmul.f32 %v2369, 0.5
    %2372 = vrot.lane.b32.xlu0 %v2363, 64
    %v2373 = vpop.permute.xlu0 %2372
    %v2375 = vmul.f32 %v2370, %v2373
    %2377 = vrot.lane.b32.xlu0 %v2375, 64
    %v2378 = vpop.permute.xlu0 %2377
    %v2380 = vadd.f32 %v1761, %v2378
    %v2381 = vtanh.pop %v2380
    %v2382 = vsub.f32 %v2290, %v2381
    %2384 = vrot.lane.b32.xlu0 %v2382, 96
    %v2385 = vpop.permute.xlu0 %2384
    %v2387 = vmul.f32 %v2370, %v2385
    %2389 = vrot.lane.b32.xlu0 %v2387, 32
    %v2390 = vpop.permute.xlu0 %2389
    %v2392 = vadd.f32 %v2381, %v2390
    %2394 = vrot.lane.b32.xlu0 %v2392, 64
    %v2395 = vpop.permute.xlu0 %2394
    %v2396 = vsel %vm972, %v2395, 0
    %2398 = vmatprep.subr.mxu0 0.0
    %2399 = vmatpush1.msra.mxu0 0.0
    %2400 = vmatprep.subr.mxu0 0.0
    %2401 = vmatpush1.msra.mxu0 0.0
    %2402 = vmatprep.subr.mxu0 0.0
    %2403 = vmatpush1.msra.mxu0 0.0
    %2404 = vmatprep.subr.mxu0 0.0
    %2405 = vmatpush1.msra.mxu0 0.0
    %2406 = vmatprep.subr.mxu0 0.0
    %2407 = vmatpush1.msra.mxu0 0.0
    %2408 = vmatprep.subr.mxu0 0.0
    %2409 = vmatpush1.msra.mxu0 0.0
    %2410 = vmatprep.subr.mxu0 0.0
    %2411 = vmatpush1.msra.mxu0 0.0
    %2412 = vmatprep.subr.mxu0 0.0
    %2413 = vmatpush1.msra.mxu0 0.0
    %2414 = vmatprep.subr.mxu0 0.0
    %2415 = vmatpush1.msra.mxu0 0.0
    %2416 = vmatprep.subr.mxu0 0.0
    %2417 = vmatpush1.msra.mxu0 0.0
    %2418 = vmatprep.subr.mxu0 0.0
    %2419 = vmatpush1.msra.mxu0 0.0
    %2420 = vmatprep.subr.mxu0 0.0
    %2421 = vmatpush1.msra.mxu0 0.0
    %2422 = vmatprep.subr.mxu0 0.0
    %2423 = vmatpush1.msra.mxu0 %v1777
    %2424 = vmatprep.subr.mxu0 0.0
    %2425 = vmatpush1.msra.mxu0 %v1776
    %2426 = vmatprep.subr.mxu0 0.0
    %2427 = vmatpush1.msra.mxu0 %v1775
    %2428 = vmatprep.subr.mxu0 0.0
    %2429 = vmatpush1.msra.mxu0 %v1774
    %2430 = vmatprep.subr.mxu0 0.0
    %2431 = vmatpush2.msra.mxu0 0.0
    %2432 = vmatprep.subr.mxu0 0.0
    %2433 = vmatpush2.msra.mxu0 0.0
    %2434 = vmatprep.subr.mxu0 0.0
    %2435 = vmatpush2.msra.mxu0 0.0
    %2436 = vmatprep.subr.mxu0 0.0
    %2437 = vmatpush2.msra.mxu0 0.0
    %2438 = vmatprep.subr.mxu0 0.0
    %2439 = vmatpush2.msra.mxu0 0.0
    %2440 = vmatprep.subr.mxu0 0.0
    %2441 = vmatpush2.msra.mxu0 0.0
    %2442 = vmatprep.subr.mxu0 0.0
    %2443 = vmatpush2.msra.mxu0 0.0
    %2444 = vmatprep.subr.mxu0 0.0
    %2445 = vmatpush2.msra.mxu0 0.0
    %2446 = vmatprep.subr.mxu0 0.0
    %2447 = vmatpush2.msra.mxu0 0.0
    %2448 = vmatprep.subr.mxu0 0.0
    %2449 = vmatpush2.msra.mxu0 0.0
    %2450 = vmatprep.subr.mxu0 0.0
    %2451 = vmatpush2.msra.mxu0 0.0
    %2452 = vmatprep.subr.mxu0 0.0
    %2453 = vmatpush2.msra.mxu0 0.0
    %2454 = vmatprep.subr.mxu0 0.0
    %2455 = vmatpush2.msra.mxu0 0.0
    %2456 = vmatprep.subr.mxu0 0.0
    %2457 = vmatpush2.msra.mxu0 0.0
    %2458 = vmatprep.subr.mxu0 0.0
    %2459 = vmatpush2.msra.mxu0 0.0
    %2460 = vmatprep.subr.mxu0 0.0
    %2461 = vmatpush2.msra.mxu0 0.0
    %2462 = vmatprep.mubr.f32.mxu0 0.0
    %2463 = vmatmul.mubr.f32.gmra.mxu0 %v2396
    %v2464 = vpop.f32.mrf.mxu0
    %v2465 = vadd.f32 %v1782, %v2464
    %v2466 = vpop.f32.mrf.mxu0
    %2467 = vdwg.mxu0
    %v2468 = vadd.f32 %v1766, %v2465
    %v2469 = vmul.f32 %v2468, 0.5
    %v2470 = vtanh.pop %v2469
    %v2471 = vadd.f32 %v2470, 1.0
    %v2472 = vmul.f32 %v2471, 0.5
    %2474 = vrot.lane.b32.xlu0 %v2465, 64
    %v2475 = vpop.permute.xlu0 %2474
    %v2477 = vmul.f32 %v2472, %v2475
    %2479 = vrot.lane.b32.xlu0 %v2477, 64
    %v2480 = vpop.permute.xlu0 %2479
    %v2482 = vadd.f32 %v1766, %v2480
    %v2483 = vtanh.pop %v2482
    %v2484 = vsub.f32 %v2392, %v2483
    %2486 = vrot.lane.b32.xlu0 %v2484, 96
    %v2487 = vpop.permute.xlu0 %2486
    %v2489 = vmul.f32 %v2472, %v2487
    %2491 = vrot.lane.b32.xlu0 %v2489, 32
    %v2492 = vpop.permute.xlu0 %2491
    %v2494 = vadd.f32 %v2483, %v2492
    %2496 = vrot.lane.b32.xlu0 %v2494, 64
    %v2497 = vpop.permute.xlu0 %2496
    %v2498 = vsel %vm972, %v2497, 0
    %2500 = vmatprep.subr.mxu0 0.0
    %2501 = vmatpush1.msra.mxu0 0.0
    %2502 = vmatprep.subr.mxu0 0.0
    %2503 = vmatpush1.msra.mxu0 0.0
    %2504 = vmatprep.subr.mxu0 0.0
    %2505 = vmatpush1.msra.mxu0 0.0
    %2506 = vmatprep.subr.mxu0 0.0
    %2507 = vmatpush1.msra.mxu0 0.0
    %2508 = vmatprep.subr.mxu0 0.0
    %2509 = vmatpush1.msra.mxu0 0.0
    %2510 = vmatprep.subr.mxu0 0.0
    %2511 = vmatpush1.msra.mxu0 0.0
    %2512 = vmatprep.subr.mxu0 0.0
    %2513 = vmatpush1.msra.mxu0 0.0
    %2514 = vmatprep.subr.mxu0 0.0
    %2515 = vmatpush1.msra.mxu0 0.0
    %2516 = vmatprep.subr.mxu0 0.0
    %2517 = vmatpush1.msra.mxu0 0.0
    %2518 = vmatprep.subr.mxu0 0.0
    %2519 = vmatpush1.msra.mxu0 0.0
    %2520 = vmatprep.subr.mxu0 0.0
    %2521 = vmatpush1.msra.mxu0 0.0
    %2522 = vmatprep.subr.mxu0 0.0
    %2523 = vmatpush1.msra.mxu0 0.0
    %2524 = vmatprep.subr.mxu0 0.0
    %2525 = vmatpush1.msra.mxu0 %v1777
    %2526 = vmatprep.subr.mxu0 0.0
    %2527 = vmatpush1.msra.mxu0 %v1776
    %2528 = vmatprep.subr.mxu0 0.0
    %2529 = vmatpush1.msra.mxu0 %v1775
    %2530 = vmatprep.subr.mxu0 0.0
    %2531 = vmatpush1.msra.mxu0 %v1774
    %2532 = vmatprep.subr.mxu0 0.0
    %2533 = vmatpush2.msra.mxu0 0.0
    %2534 = vmatprep.subr.mxu0 0.0
    %2535 = vmatpush2.msra.mxu0 0.0
    %2536 = vmatprep.subr.mxu0 0.0
    %2537 = vmatpush2.msra.mxu0 0.0
    %2538 = vmatprep.subr.mxu0 0.0
    %2539 = vmatpush2.msra.mxu0 0.0
    %2540 = vmatprep.subr.mxu0 0.0
    %2541 = vmatpush2.msra.mxu0 0.0
    %2542 = vmatprep.subr.mxu0 0.0
    %2543 = vmatpush2.msra.mxu0 0.0
    %2544 = vmatprep.subr.mxu0 0.0
    %2545 = vmatpush2.msra.mxu0 0.0
    %2546 = vmatprep.subr.mxu0 0.0
    %2547 = vmatpush2.msra.mxu0 0.0
    %2548 = vmatprep.subr.mxu0 0.0
    %2549 = vmatpush2.msra.mxu0 0.0
    %2550 = vmatprep.subr.mxu0 0.0
    %2551 = vmatpush2.msra.mxu0 0.0
    %2552 = vmatprep.subr.mxu0 0.0
    %2553 = vmatpush2.msra.mxu0 0.0
    %2554 = vmatprep.subr.mxu0 0.0
    %2555 = vmatpush2.msra.mxu0 0.0
    %2556 = vmatprep.subr.mxu0 0.0
    %2557 = vmatpush2.msra.mxu0 0.0
    %2558 = vmatprep.subr.mxu0 0.0
    %2559 = vmatpush2.msra.mxu0 0.0
    %2560 = vmatprep.subr.mxu0 0.0
    %2561 = vmatpush2.msra.mxu0 0.0
    %2562 = vmatprep.subr.mxu0 0.0
    %2563 = vmatpush2.msra.mxu0 0.0
    %2564 = vmatprep.mubr.f32.mxu0 0.0
    %2565 = vmatmul.mubr.f32.gmra.mxu0 %v2498
    %v2566 = vpop.f32.mrf.mxu0
    %v2567 = vadd.f32 %v1782, %v2566
    %v2568 = vpop.f32.mrf.mxu0
    %2569 = vdwg.mxu0
    %v2570 = vadd.f32 %v1771, %v2567
    %v2571 = vmul.f32 %v2570, 0.5
    %v2572 = vtanh.pop %v2571
    %v2573 = vadd.f32 %v2572, 1.0
    %v2574 = vmul.f32 %v2573, 0.5
    %2576 = vrot.lane.b32.xlu0 %v2567, 64
    %v2577 = vpop.permute.xlu0 %2576
    %v2579 = vmul.f32 %v2574, %v2577
    %2581 = vrot.lane.b32.xlu0 %v2579, 64
    %v2582 = vpop.permute.xlu0 %2581
    %v2584 = vadd.f32 %v1771, %v2582
    %v2585 = vtanh.pop %v2584
    %v2586 = vsub.f32 %v2494, %v2585
    %2588 = vrot.lane.b32.xlu0 %v2586, 96
    %v2589 = vpop.permute.xlu0 %2588
    %v2591 = vmul.f32 %v2574, %v2589
    %2593 = vrot.lane.b32.xlu0 %v2591, 32
    %v2594 = vpop.permute.xlu0 %2593
    %v2596 = vadd.f32 %v2585, %v2594
    %v2597 = vld [vmem:[#allocation2 + $0xc8] sm:$0xff]
    %v2598 = vld [vmem:[#allocation2 + $0xd0] sm:$0xff]
    %v2599 = vld [vmem:[#allocation2 + $0xd8] sm:$0xff]
    %v2600 = vld [vmem:[#allocation2 + $0xe0] sm:$0xff]
    %v2601 = vld [vmem:[#allocation2 + $0xe8] sm:$0x1]
    %v2602 = vlaneseq
    %v2603 = vshrl.u32 %v2602, 7
    %v2604 = vsub.s32 0, %v2603
    %v2605 = vrot.slane %v2601, %v2604
    %2607 = vrot.lane.b32.xlu0 %v2596, 64
    %v2608 = vpop.permute.xlu0 %2607
    %v2609 = vsel %vm972, %v2608, 0
    %2611 = vmatprep.subr.mxu0 0.0
    %2612 = vmatpush1.msra.mxu0 0.0
    %2613 = vmatprep.subr.mxu0 0.0
    %2614 = vmatpush1.msra.mxu0 0.0
    %2615 = vmatprep.subr.mxu0 0.0
    %2616 = vmatpush1.msra.mxu0 0.0
    %2617 = vmatprep.subr.mxu0 0.0
    %2618 = vmatpush1.msra.mxu0 0.0
    %2619 = vmatprep.subr.mxu0 0.0
    %2620 = vmatpush1.msra.mxu0 0.0
    %2621 = vmatprep.subr.mxu0 0.0
    %2622 = vmatpush1.msra.mxu0 0.0
    %2623 = vmatprep.subr.mxu0 0.0
    %2624 = vmatpush1.msra.mxu0 0.0
    %2625 = vmatprep.subr.mxu0 0.0
    %2626 = vmatpush1.msra.mxu0 0.0
    %2627 = vmatprep.subr.mxu0 0.0
    %2628 = vmatpush1.msra.mxu0 0.0
    %2629 = vmatprep.subr.mxu0 0.0
    %2630 = vmatpush1.msra.mxu0 0.0
    %2631 = vmatprep.subr.mxu0 0.0
    %2632 = vmatpush1.msra.mxu0 0.0
    %2633 = vmatprep.subr.mxu0 0.0
    %2634 = vmatpush1.msra.mxu0 0.0
    %2635 = vmatprep.subr.mxu0 0.0
    %2636 = vmatpush1.msra.mxu0 %v2600
    %2637 = vmatprep.subr.mxu0 0.0
    %2638 = vmatpush1.msra.mxu0 %v2599
    %2639 = vmatprep.subr.mxu0 0.0
    %2640 = vmatpush1.msra.mxu0 %v2598
    %2641 = vmatprep.subr.mxu0 0.0
    %2642 = vmatpush1.msra.mxu0 %v2597
    %2643 = vmatprep.subr.mxu0 0.0
    %2644 = vmatpush2.msra.mxu0 0.0
    %2645 = vmatprep.subr.mxu0 0.0
    %2646 = vmatpush2.msra.mxu0 0.0
    %2647 = vmatprep.subr.mxu0 0.0
    %2648 = vmatpush2.msra.mxu0 0.0
    %2649 = vmatprep.subr.mxu0 0.0
    %2650 = vmatpush2.msra.mxu0 0.0
    %2651 = vmatprep.subr.mxu0 0.0
    %2652 = vmatpush2.msra.mxu0 0.0
    %2653 = vmatprep.subr.mxu0 0.0
    %2654 = vmatpush2.msra.mxu0 0.0
    %2655 = vmatprep.subr.mxu0 0.0
    %2656 = vmatpush2.msra.mxu0 0.0
    %2657 = vmatprep.subr.mxu0 0.0
    %2658 = vmatpush2.msra.mxu0 0.0
    %2659 = vmatprep.subr.mxu0 0.0
    %2660 = vmatpush2.msra.mxu0 0.0
    %2661 = vmatprep.subr.mxu0 0.0
    %2662 = vmatpush2.msra.mxu0 0.0
    %2663 = vmatprep.subr.mxu0 0.0
    %2664 = vmatpush2.msra.mxu0 0.0
    %2665 = vmatprep.subr.mxu0 0.0
    %2666 = vmatpush2.msra.mxu0 0.0
    %2667 = vmatprep.subr.mxu0 0.0
    %2668 = vmatpush2.msra.mxu0 0.0
    %2669 = vmatprep.subr.mxu0 0.0
    %2670 = vmatpush2.msra.mxu0 0.0
    %2671 = vmatprep.subr.mxu0 0.0
    %2672 = vmatpush2.msra.mxu0 0.0
    %2673 = vmatprep.subr.mxu0 0.0
    %2674 = vmatpush2.msra.mxu0 0.0
    %2675 = vmatprep.mubr.f32.mxu0 0.0
    %2676 = vmatmul.mubr.f32.gmra.mxu0 %v2609
    %v2677 = vpop.f32.mrf.mxu0
    %v2678 = vadd.f32 %v2605, %v2677
    %v2679 = vpop.f32.mrf.mxu0
    %2680 = vdwg.mxu0
    %2681 = vst [vmem:[#allocation5] sm:$0xff] %v2678
    // Predicated region
    $region18: #{tpu_custom_call.1} parent=1 // pred_check
      _
    $region19: #{tpu_custom_call.1} parent=1 // pred_check_branch
      %2683 = sbr.rel (0) target = $region21
    $region20: #{tpu_custom_call.1} parent=1 // pred_region
      %s2685 = ssub.s32 128, 128
      %2686 = vsyncadd [#allocation4], %s2685
      %s2688 = sshll.u32 [#allocation5], 4
      %s2689 = int_to_ptr.vmem [resolvable:$true] %s2688
      %2691 = dma.vmem_to_hbm [thread:$0]  %s2689, 128, %s3, [#allocation4]
    $region21: #{tpu_custom_call.1} parent=1 // pred_fallthru
      _
    // Predicated region
    $region22: #{tpu_custom_call.1} parent=1 // pred_check
      _
    $region23: #{tpu_custom_call.1} parent=1 // pred_check_branch
      %2693 = sbr.rel (0) target = $region25
    $region24: #{tpu_custom_call.1} parent=1 // pred_region
      %2694 = dma.done [#allocation4], 128
    $region25: #{tpu_custom_call.1} parent=1 // pred_fallthru
      _
    %2695 = vsyncpa [#allocation3], 1
    %2696 = vsyncpa [#allocation4], 1

</llo_original>
